<compile_context>
chip_gen: v7x
topology: tpu7x:2x2x1
jax: 0.10.0
libtpu: 0.0.40
codegen_flags: <defaults>
</compile_context>

<pallas_src>
import functools

import numpy as np
import jax
import jax.numpy as jnp
from jax import lax
from jax.experimental import pallas as pl
from jax.experimental.pallas import tpu as pltpu


# ----------------------------------------------------------------------------
# In-kernel helpers
# ----------------------------------------------------------------------------

def _layernorm(x, g, b, eps=1e-5):
    mu = jnp.mean(x, axis=-1, keepdims=True)
    var = jnp.mean((x - mu) ** 2, axis=-1, keepdims=True)
    return (x - mu) * lax.rsqrt(var + eps) * g + b


def _linear_no_t(x, w):
    # y = x @ W.T with W in PyTorch [out, in] layout, WITHOUT materializing a
    # transpose: contract x's last dim against W's dim 1 directly on the MXU.
    return lax.dot_general(
        x, w,
        dimension_numbers=(((x.ndim - 1,), (1,)), ((), ())),
        preferred_element_type=jnp.float32)


# ----------------------------------------------------------------------------
# Fused GPT kernel: grid axis = transformer layer, decoder at the last step
# ----------------------------------------------------------------------------

def gpt_fused_kernel(x_ref, ln1g_ref, ln1b_ref, wqkv_ref,
                     ln2g_ref, ln2b_ref, w1_ref, b1_ref, w2_ref, b2_ref,
                     decw_ref, decb_ref, o_ref,
                     x_scr, attn_scr, *, num_heads):
    l = pl.program_id(0)
    nl = pl.num_programs(0)

    @pl.when(l == 0)
    def _():
        x_scr[...] = x_ref[...]            # activation becomes VMEM-resident

    x = x_scr[...]                         # (B, T, D) f32, carried across layers
    B, T, D = x.shape
    dph = D // num_heads

    # --- ln1 + fused block-diagonal QKV (1/sqrt(d_k) folded into V rows) -----
    xln = _layernorm(x, ln1g_ref[0], ln1b_ref[0])
    qkv = _linear_no_t(xln, wqkv_ref[0])   # (B, T, 3D), lane-dense output

    # Causal mask built in-kernel (iota + compare) — no (T,T) DMA per layer.
    row = lax.broadcasted_iota(jnp.int32, (T, T), 0)
    col = lax.broadcasted_iota(jnp.int32, (T, T), 1)
    causal = (row >= col)[None]            # (1, T, T)

    # Per-head attention; head outputs go into column slices of a VMEM scratch
    # (no jnp.concatenate relayout).  H is small and static here.
    # TODO(synk): flash-style online-softmax KV tiling for large T; dropout on
    # attention / MHA output omitted (eval-mode identity).
    for h in range(num_heads):
        qh = qkv[:, :, h * dph:(h + 1) * dph]
        kh = qkv[:, :, D + h * dph:D + (h + 1) * dph]
        vh = qkv[:, :, 2 * D + h * dph:2 * D + (h + 1) * dph]
        s = jnp.einsum('btd,bsd->bts', qh, kh,
                       preferred_element_type=jnp.float32)       # (B, T, T)
        s = jnp.where(causal, s, -1e30)    # finite sentinel (tiling/bf16 safe)
        p = jax.nn.softmax(s, axis=-1)
        attn_scr[:, :, h * dph:(h + 1) * dph] = jnp.einsum(
            'bts,bsd->btd', p, vh, preferred_element_type=jnp.float32)

    x2 = attn_scr[...] + x                 # residual 1

    # --- ln2 + FeedForward (Linear+ReLU, Linear+ReLU) + residual 2 -----------
    xln2 = _layernorm(x2, ln2g_ref[0], ln2b_ref[0])
    h1 = jnp.maximum(_linear_no_t(xln2, w1_ref[0]) + b1_ref[0], 0.0)
    h2 = jnp.maximum(_linear_no_t(h1, w2_ref[0]) + b2_ref[0], 0.0)
    x3 = h2 + x2

    x_scr[...] = x3                        # carry to next layer

    # Decoder fused into the same call; only the last step writes the output.
    @pl.when(l == nl - 1)
    def _():
        o_ref[...] = (_linear_no_t(x3, decw_ref[...]) + decb_ref[...]
                      ).astype(o_ref.dtype)


# ----------------------------------------------------------------------------
# Wrapper around pallas_call
# ----------------------------------------------------------------------------

def gpt_pallas(x_emb, packed, num_heads):
    B, T, D = x_emb.shape
    L = packed["wqkv"].shape[0]
    Vp = packed["dec_w"].shape[0]          # lane-padded vocab

    def per_layer(shape):                  # stacked (L, ...) param, step l
        blk = (1,) + tuple(shape[1:])
        zeros = (0,) * (len(shape) - 1)
        return pl.BlockSpec(blk, lambda l, z=zeros: (l,) + z)

    def resident(shape):                   # constant index -> DMA'd once
        zeros = (0,) * len(shape)
        return pl.BlockSpec(tuple(shape), lambda l, z=zeros: z)

    kernel = functools.partial(gpt_fused_kernel, num_heads=num_heads)
    return pl.pallas_call(
        kernel,
        out_shape=jax.ShapeDtypeStruct((B, T, Vp), x_emb.dtype),
        grid=(L,),
        in_specs=[
            resident((B, T, D)),                       # x (embedded tokens)
            per_layer(packed["ln1_g"].shape),          # (L, 1, D)
            per_layer(packed["ln1_b"].shape),
            per_layer(packed["wqkv"].shape),           # (L, 3D, D)
            per_layer(packed["ln2_g"].shape),
            per_layer(packed["ln2_b"].shape),
            per_layer(packed["w1"].shape),             # (L, D, D)
            per_layer(packed["b1"].shape),
            per_layer(packed["w2"].shape),
            per_layer(packed["b2"].shape),
            resident(packed["dec_w"].shape),           # (Vp, D)
            resident(packed["dec_b"].shape),           # (1, Vp)
        ],
        out_specs=resident((B, T, Vp)),
        scratch_shapes=[pltpu.VMEM((B, T, D), jnp.float32),   # running activation
                        pltpu.VMEM((B, T, D), jnp.float32)],  # attention output
        compiler_params=pltpu.CompilerParams(
            dimension_semantics=("arbitrary",)),
    )(x_emb,
      packed["ln1_g"], packed["ln1_b"], packed["wqkv"],
      packed["ln2_g"], packed["ln2_b"],
      packed["w1"], packed["b1"], packed["w2"], packed["b2"],
      packed["dec_w"], packed["dec_b"])


# ----------------------------------------------------------------------------
# One-time parameter packing (block-diag QKV fusion, scale fold, layer stack)
# ----------------------------------------------------------------------------

def pack_params(params, num_heads, lane=128):
    D = params["embedding"].shape[1]
    dph = D // num_heads
    scale = 1.0 / float(np.sqrt(dph))

    # NOTE: block-diagonal fusion multiplies H x more weight than necessary;
    # fine at small H (here H=2).  For large H use a batched per-head matmul.
    def block_diag(w):                     # w: (H, dph, dph) in [out, in] layout
        full = jnp.zeros((D, D), w.dtype)
        for h in range(num_heads):
            full = full.at[h * dph:(h + 1) * dph, h * dph:(h + 1) * dph].set(w[h])
        return full

    keys = ("ln1_g", "ln1_b", "wqkv", "ln2_g", "ln2_b", "w1", "b1", "w2", "b2")
    stacks = {k: [] for k in keys}
    for blk in params["blocks"]:
        stacks["ln1_g"].append(blk["ln1_g"])
        stacks["ln1_b"].append(blk["ln1_b"])
        # (attn @ (x @ (s*Wv).T)) == (attn @ (x @ Wv.T)) * s  -> fold post-softmax
        # 1/sqrt(d_k) scale (as in the reference module) into the V rows.
        stacks["wqkv"].append(jnp.concatenate(
            [block_diag(blk["wq"]), block_diag(blk["wk"]),
             block_diag(blk["wv"]) * scale], axis=0))            # (3D, D)
        stacks["ln2_g"].append(blk["ln2_g"])
        stacks["ln2_b"].append(blk["ln2_b"])
        stacks["w1"].append(blk["w1"])
        stacks["b1"].append(blk["b1"])
        stacks["w2"].append(blk["w2"])
        stacks["b2"].append(blk["b2"])
    packed = {k: jnp.stack(v) for k, v in stacks.items()}

    # Pad vocab to a multiple of 128 so the kernel's output last dim is
    # lane-dense (unmasked stores); the wrapper slices it back to dict_size.
    V = params["dec_w"].shape[0]
    Vp = int(np.ceil(V / lane) * lane)
    packed["dec_w"] = jnp.pad(params["dec_w"], ((0, Vp - V), (0, 0)))
    packed["dec_b"] = jnp.pad(params["dec_b"], ((0, 0), (0, Vp - V)))
    return packed


# ----------------------------------------------------------------------------
# GPT forward (glue in plain JAX, hot path in one Pallas call)
# ----------------------------------------------------------------------------

def positional_encoding(l, dim):
    # Exact replica of GPT._positional_encoding (including its unusual formula).
    a = []
    for i in range(1, dim + 1):
        trig = np.sin if i % 2 == 0 else np.cos
        a.append(trig(np.arange(l) * (i / 10000 ** (2 * i / dim))))
    return jnp.asarray(np.stack(a, axis=1).astype(np.float32))


@functools.partial(jax.jit, static_argnames=("num_heads",))
def gpt_forward(tokens, embedding, packed, *, num_heads):
    B, T = tokens.shape
    V, D = embedding.shape
    # TODO(synk): embedding gather stays in XLA (no Pallas win at this size).
    x = jnp.take(embedding, tokens, axis=0)                  # (B, T, D)
    x = x + positional_encoding(T, D)[None]                  # constant under jit
    logits_padded = gpt_pallas(x, packed, num_heads)         # (B, T, Vp)
    return logits_padded[:, :, :V]


# ----------------------------------------------------------------------------
# Pure-JAX reference (for correctness check)
# ----------------------------------------------------------------------------

def gpt_forward_ref(tokens, params):
    B, T = tokens.shape
    x = jnp.take(params["embedding"], tokens, axis=0)
    x = x + positional_encoding(T, x.shape[-1])[None]
    mask = jnp.asarray(np.tril(np.ones((T, T), np.float32)))
    for blk in params["blocks"]:
        xln = _layernorm(x, blk["ln1_g"], blk["ln1_b"])
        H, dph, _ = blk["wq"].shape
        heads = []
        for h in range(H):
            xh = xln[:, :, h * dph:(h + 1) * dph]
            q = xh @ blk["wq"][h].T
            k = xh @ blk["wk"][h].T
            v = xh @ blk["wv"][h].T
            attn = jnp.einsum("btd,bsd->bts", q, k)
            attn = jnp.where(mask == 0, -jnp.inf, attn)
            attn = jax.nn.softmax(attn, axis=-1)
            heads.append(jnp.einsum("bts,bsd->btd", attn, v) / (dph ** 0.5))
        x2 = jnp.concatenate(heads, axis=-1) + x
        xln2 = _layernorm(x2, blk["ln2_g"], blk["ln2_b"])
        h1 = jnp.maximum(xln2 @ blk["w1"].T + blk["b1"], 0.0)
        h2 = jnp.maximum(h1 @ blk["w2"].T + blk["b2"], 0.0)
        x = h2 + x2
    return x @ params["dec_w"].T + params["dec_b"]


# ----------------------------------------------------------------------------
# Parameter init (PyTorch layout: Linear weights are [out, in])
# ----------------------------------------------------------------------------

def init_params(key, d_in, dict_size, num_heads, num_blocks):
    dph = d_in // num_heads
    keys = iter(jax.random.split(key, 8 + num_blocks * 12))
    nxt = lambda: next(keys)
    p = {
        "embedding": jax.random.normal(nxt(), (dict_size, d_in), jnp.float32) * 0.1,
        "dec_w": jax.random.normal(nxt(), (dict_size, d_in), jnp.float32) * 0.1,
        "dec_b": jax.random.normal(nxt(), (1, dict_size), jnp.float32) * 0.1,
        "blocks": [],
    }
    for _ in range(num_blocks):
        blk = {
            "ln1_g": jnp.ones((1, d_in), jnp.float32),
            "ln1_b": jnp.zeros((1, d_in), jnp.float32),
            "ln2_g": jnp.ones((1, d_in), jnp.float32),
            "ln2_b": jnp.zeros((1, d_in), jnp.float32),
            "wq": jax.random.normal(nxt(), (num_heads, dph, dph), jnp.float32) * 0.1,
            "wk": jax.random.normal(nxt(), (num_heads, dph, dph), jnp.float32) * 0.1,
            "wv": jax.random.normal(nxt(), (num_heads, dph, dph), jnp.float32) * 0.1,
            "w1": jax.random.normal(nxt(), (d_in, d_in), jnp.float32) * 0.1,
            "b1": jax.random.normal(nxt(), (1, d_in), jnp.float32) * 0.1,
            "w2": jax.random.normal(nxt(), (d_in, d_in), jnp.float32) * 0.1,
            "b2": jax.random.normal(nxt(), (1, d_in), jnp.float32) * 0.1,
        }
        p["blocks"].append(blk)
    return p


# ----------------------------------------------------------------------------
# Main
# ----------------------------------------------------------------------------

if __name__ == "__main__":
    B, T = 2, 8
    d_in = 64
    dict_size = 32
    num_heads = 2
    num_blocks = 2
    # block_size >= T; dropout is identity (eval mode); no targets path.

    key = jax.random.PRNGKey(0)
    k_tok, k_par = jax.random.split(key)
    tokens = jax.random.randint(k_tok, (B, T), 0, dict_size, dtype=jnp.int32)
    params = init_params(k_par, d_in, dict_size, num_heads, num_blocks)

    packed = pack_params(params, num_heads)          # one-time weight packing

    logits = gpt_forward(tokens, params["embedding"], packed, num_heads=num_heads)
    logits = jax.block_until_ready(logits)

    ref = gpt_forward_ref(tokens, params)
    np.testing.assert_allclose(np.asarray(logits), np.asarray(ref),
                               rtol=2e-4, atol=2e-4)

    assert logits.shape == (B, T, dict_size)
    print("KERNEL_OK")
</pallas_src>

<mosaic_0001>
module attributes {stable_mosaic.version = 11 : i64} {
  func.func @gpt_fused_kernel(%arg0: i32, %arg1: memref<2x8x64xf32, #tpu.memory_space<vmem>>, %arg2: memref<1x1x64xf32, #tpu.memory_space<vmem>>, %arg3: memref<1x1x64xf32, #tpu.memory_space<vmem>>, %arg4: memref<1x192x64xf32, #tpu.memory_space<vmem>>, %arg5: memref<1x1x64xf32, #tpu.memory_space<vmem>>, %arg6: memref<1x1x64xf32, #tpu.memory_space<vmem>>, %arg7: memref<1x64x64xf32, #tpu.memory_space<vmem>>, %arg8: memref<1x1x64xf32, #tpu.memory_space<vmem>>, %arg9: memref<1x64x64xf32, #tpu.memory_space<vmem>>, %arg10: memref<1x1x64xf32, #tpu.memory_space<vmem>>, %arg11: memref<128x64xf32, #tpu.memory_space<vmem>>, %arg12: memref<1x128xf32, #tpu.memory_space<vmem>>, %arg13: memref<2x8x128xf32, #tpu.memory_space<vmem>>, %arg14: memref<2x8x64xf32, #tpu.memory_space<vmem>>, %arg15: memref<2x8x64xf32, #tpu.memory_space<vmem>>) attributes {dimension_semantics = [#tpu.dimension_semantics<arbitrary>], iteration_bounds = array<i64: 2>, scalar_prefetch = 0 : i64, scratch_operands = 2 : i64, tpu.core_type = #tpu.core_type<tc>, window_params = [{pipeline_mode = #tpu.pipeline_mode<synchronous>, transform_indices = @transform_0, window_bounds = array<i64: 2, 8, 64>}, {transform_indices = @transform_1, window_bounds = array<i64: 1, 1, 64>}, {transform_indices = @transform_2, window_bounds = array<i64: 1, 1, 64>}, {transform_indices = @transform_3, window_bounds = array<i64: 1, 192, 64>}, {transform_indices = @transform_4, window_bounds = array<i64: 1, 1, 64>}, {transform_indices = @transform_5, window_bounds = array<i64: 1, 1, 64>}, {transform_indices = @transform_6, window_bounds = array<i64: 1, 64, 64>}, {transform_indices = @transform_7, window_bounds = array<i64: 1, 1, 64>}, {transform_indices = @transform_8, window_bounds = array<i64: 1, 64, 64>}, {transform_indices = @transform_9, window_bounds = array<i64: 1, 1, 64>}, {pipeline_mode = #tpu.pipeline_mode<synchronous>, transform_indices = @transform_10, window_bounds = array<i64: 128, 64>}, {pipeline_mode = #tpu.pipeline_mode<synchronous>, transform_indices = @transform_11, window_bounds = array<i64: 1, 128>}, {pipeline_mode = #tpu.pipeline_mode<synchronous>, transform_indices = @transform_12, window_bounds = array<i64: 2, 8, 128>}]} {
    %c0_i32 = arith.constant 0 : i32
    %0 = arith.cmpi eq, %arg0, %c0_i32 : i32
    %1 = arith.extui %0 : i1 to i32
    %c0_i32_0 = arith.constant 0 : i32
    %2 = arith.cmpi ne, %1, %c0_i32_0 : i32
    scf.if %2 {
      %c0_68 = arith.constant 0 : index
      %c0_69 = arith.constant 0 : index
      %c0_70 = arith.constant 0 : index
      %136 = vector.load %arg1[%c0_68, %c0_69, %c0_70] : memref<2x8x64xf32, #tpu.memory_space<vmem>>, vector<2x8x64xf32>
      %c0_71 = arith.constant 0 : index
      %c0_72 = arith.constant 0 : index
      %c0_73 = arith.constant 0 : index
      %137 = vector.load %arg14[%c0_71, %c0_72, %c0_73] : memref<2x8x64xf32, #tpu.memory_space<vmem>>, vector<2x8x64xf32>
      tpu.vector_store %arg14[%c0_71, %c0_72, %c0_73], %136 {strides = array<i32>} : memref<2x8x64xf32, #tpu.memory_space<vmem>>, vector<2x8x64xf32>,
    } else {
    }
    %c0 = arith.constant 0 : index
    %c0_1 = arith.constant 0 : index
    %c0_2 = arith.constant 0 : index
    %3 = vector.load %arg14[%c0, %c0_1, %c0_2] : memref<2x8x64xf32, #tpu.memory_space<vmem>>, vector<2x8x64xf32>
    %c0_3 = arith.constant 0 : index
    %c0_4 = arith.constant 0 : index
    %c0_5 = arith.constant 0 : index
    %4 = vector.load %arg2[%c0_3, %c0_4, %c0_5] : memref<1x1x64xf32, #tpu.memory_space<vmem>>, vector<1x1x64xf32>
    %5 = vector.shape_cast %4 : vector<1x1x64xf32> to vector<1x64xf32>
    %c0_6 = arith.constant 0 : index
    %c0_7 = arith.constant 0 : index
    %c0_8 = arith.constant 0 : index
    %6 = vector.load %arg3[%c0_6, %c0_7, %c0_8] : memref<1x1x64xf32, #tpu.memory_space<vmem>>, vector<1x1x64xf32>
    %7 = vector.shape_cast %6 : vector<1x1x64xf32> to vector<1x64xf32>
    %cst = arith.constant dense<0.000000e+00> : vector<2x8xf32>
    %8 = vector.multi_reduction <add>, %3, %cst [2] : vector<2x8x64xf32> to vector<2x8xf32>
    %9 = vector.shape_cast %8 : vector<2x8xf32> to vector<2x8x1xf32>
    %cst_9 = arith.constant 6.400000e+01 : f32
    %10 = vector.broadcast %cst_9 : f32 to vector<2x8x1xf32>
    %11 = arith.divf %9, %10 : vector<2x8x1xf32>
    %12 = vector.broadcast %11 : vector<2x8x1xf32> to vector<2x8x64xf32>
    %13 = arith.subf %3, %12 : vector<2x8x64xf32>
    %14 = arith.mulf %13, %13 : vector<2x8x64xf32>
    %cst_10 = arith.constant dense<0.000000e+00> : vector<2x8xf32>
    %15 = vector.multi_reduction <add>, %14, %cst_10 [2] : vector<2x8x64xf32> to vector<2x8xf32>
    %16 = vector.shape_cast %15 : vector<2x8xf32> to vector<2x8x1xf32>
    %cst_11 = arith.constant 6.400000e+01 : f32
    %17 = vector.broadcast %cst_11 : f32 to vector<2x8x1xf32>
    %18 = arith.divf %16, %17 : vector<2x8x1xf32>
    %19 = vector.broadcast %11 : vector<2x8x1xf32> to vector<2x8x64xf32>
    %20 = arith.subf %3, %19 : vector<2x8x64xf32>
    %cst_12 = arith.constant 9.99999974E-6 : f32
    %21 = vector.broadcast %cst_12 : f32 to vector<2x8x1xf32>
    %22 = arith.addf %18, %21 : vector<2x8x1xf32>
    %23 = math.rsqrt %22 : vector<2x8x1xf32>
    %24 = vector.broadcast %23 : vector<2x8x1xf32> to vector<2x8x64xf32>
    %25 = arith.mulf %20, %24 : vector<2x8x64xf32>
    %26 = vector.shape_cast %5 : vector<1x64xf32> to vector<1x1x64xf32>
    %27 = vector.broadcast %26 : vector<1x1x64xf32> to vector<2x8x64xf32>
    %28 = arith.mulf %25, %27 : vector<2x8x64xf32>
    %29 = vector.shape_cast %7 : vector<1x64xf32> to vector<1x1x64xf32>
    %30 = vector.broadcast %29 : vector<1x1x64xf32> to vector<2x8x64xf32>
    %31 = arith.addf %28, %30 : vector<2x8x64xf32>
    %c0_13 = arith.constant 0 : index
    %c0_14 = arith.constant 0 : index
    %c0_15 = arith.constant 0 : index
    %32 = vector.load %arg4[%c0_13, %c0_14, %c0_15] : memref<1x192x64xf32, #tpu.memory_space<vmem>>, vector<1x192x64xf32>
    %33 = vector.shape_cast %32 : vector<1x192x64xf32> to vector<192x64xf32>
    %cst_16 = arith.constant dense<0.000000e+00> : vector<2x8x192xf32>
    %34 = tpu.matmul %31, %33, %cst_16 {dimension_numbers = #tpu.dot_dimension_numbers<[2], [1], [0, 1], [0], [0, 0, 0, 1, 1, 0], [], []>} : vector<2x8x64xf32>, vector<192x64xf32>, vector<2x8x192xf32> -> vector<2x8x192xf32>
    %35 = tpu.iota {dimensions = array<i32: 0>} : vector<8x8xi32>
    %36 = tpu.iota {dimensions = array<i32: 1>} : vector<8x8xi32>
    %37 = arith.cmpi sge, %35, %36 : vector<8x8xi32>
    %38 = vector.shape_cast %37 : vector<8x8xi1> to vector<1x8x8xi1>
    %39 = vector.extract_strided_slice %34 {offsets = [0, 0, 0], sizes = [2, 8, 32], strides = [1, 1, 1]} : vector<2x8x192xf32> to vector<2x8x32xf32>
    %40 = vector.extract_strided_slice %34 {offsets = [0, 0, 64], sizes = [2, 8, 32], strides = [1, 1, 1]} : vector<2x8x192xf32> to vector<2x8x32xf32>
    %41 = vector.extract_strided_slice %34 {offsets = [0, 0, 128], sizes = [2, 8, 32], strides = [1, 1, 1]} : vector<2x8x192xf32> to vector<2x8x32xf32>
    "tpu.trace_start"() <{level = 10 : i32, message = "btd,bsd->bts"}> : () -> ()
    %cst_17 = arith.constant dense<0.000000e+00> : vector<2x8x8xf32>
    %42 = tpu.matmul %39, %40, %cst_17 {dimension_numbers = #tpu.dot_dimension_numbers<[2], [2], [1], [1], [0, 0, 0, 1, 1, 1], [0], [0]>} : vector<2x8x32xf32>, vector<2x8x32xf32>, vector<2x8x8xf32> -> vector<2x8x8xf32>
    %cst_18 = arith.constant -1.000000e+30 : f32
    "tpu.trace_stop"() : () -> ()
    %43 = vector.shape_cast %38 : vector<1x8x8xi1> to vector<1x8x8xi1>
    %44 = vector.broadcast %43 : vector<1x8x8xi1> to vector<2x8x8xi1>
    %45 = vector.broadcast %cst_18 : f32 to vector<2x8x8xf32>
    %46 = arith.select %44, %42, %45 : vector<2x8x8xi1>, vector<2x8x8xf32>
    %cst_19 = arith.constant dense<0xFF800000> : vector<2x8xf32>
    %47 = vector.multi_reduction <maximumf>, %46, %cst_19 [2] : vector<2x8x8xf32> to vector<2x8xf32>
    %cst_20 = arith.constant 0xFF800000 : f32
    %48 = vector.broadcast %cst_20 : f32 to vector<2x8xf32>
    %49 = arith.maximumf %48, %47 : vector<2x8xf32>
    %50 = vector.shape_cast %49 : vector<2x8xf32> to vector<2x8x1xf32>
    %51 = vector.broadcast %50 : vector<2x8x1xf32> to vector<2x8x8xf32>
    %52 = arith.subf %46, %51 : vector<2x8x8xf32>
    %53 = math.exp %52 : vector<2x8x8xf32>
    %cst_21 = arith.constant dense<0.000000e+00> : vector<2x8xf32>
    %54 = vector.multi_reduction <add>, %53, %cst_21 [2] : vector<2x8x8xf32> to vector<2x8xf32>
    %55 = vector.shape_cast %54 : vector<2x8xf32> to vector<2x8x1xf32>
    %56 = vector.broadcast %55 : vector<2x8x1xf32> to vector<2x8x8xf32>
    %57 = arith.divf %53, %56 : vector<2x8x8xf32>
    "tpu.trace_start"() <{level = 10 : i32, message = "bts,bsd->btd"}> : () -> ()
    %cst_22 = arith.constant dense<0.000000e+00> : vector<2x8x32xf32>
    %58 = tpu.matmul %57, %41, %cst_22 {dimension_numbers = #tpu.dot_dimension_numbers<[2], [1], [1], [2], [0, 0, 0, 1, 1, 2], [0], [0]>} : vector<2x8x8xf32>, vector<2x8x32xf32>, vector<2x8x32xf32> -> vector<2x8x32xf32>
    "tpu.trace_stop"() : () -> ()
    %c0_23 = arith.constant 0 : index
    %c0_24 = arith.constant 0 : index
    %c0_25 = arith.constant 0 : index
    %59 = vector.load %arg15[%c0_23, %c0_24, %c0_25] : memref<2x8x64xf32, #tpu.memory_space<vmem>>, vector<2x8x32xf32>
    tpu.vector_store %arg15[%c0_23, %c0_24, %c0_25], %58 {strides = array<i32>} : memref<2x8x64xf32, #tpu.memory_space<vmem>>, vector<2x8x32xf32>,
    %60 = vector.extract_strided_slice %34 {offsets = [0, 0, 32], sizes = [2, 8, 32], strides = [1, 1, 1]} : vector<2x8x192xf32> to vector<2x8x32xf32>
    %61 = vector.extract_strided_slice %34 {offsets = [0, 0, 96], sizes = [2, 8, 32], strides = [1, 1, 1]} : vector<2x8x192xf32> to vector<2x8x32xf32>
    %62 = vector.extract_strided_slice %34 {offsets = [0, 0, 160], sizes = [2, 8, 32], strides = [1, 1, 1]} : vector<2x8x192xf32> to vector<2x8x32xf32>
    "tpu.trace_start"() <{level = 10 : i32, message = "btd,bsd->bts"}> : () -> ()
    %cst_26 = arith.constant dense<0.000000e+00> : vector<2x8x8xf32>
    %63 = tpu.matmul %60, %61, %cst_26 {dimension_numbers = #tpu.dot_dimension_numbers<[2], [2], [1], [1], [0, 0, 0, 1, 1, 1], [0], [0]>} : vector<2x8x32xf32>, vector<2x8x32xf32>, vector<2x8x8xf32> -> vector<2x8x8xf32>
    %cst_27 = arith.constant -1.000000e+30 : f32
    "tpu.trace_stop"() : () -> ()
    %64 = vector.shape_cast %38 : vector<1x8x8xi1> to vector<1x8x8xi1>
    %65 = vector.broadcast %64 : vector<1x8x8xi1> to vector<2x8x8xi1>
    %66 = vector.broadcast %cst_27 : f32 to vector<2x8x8xf32>
    %67 = arith.select %65, %63, %66 : vector<2x8x8xi1>, vector<2x8x8xf32>
    %cst_28 = arith.constant dense<0xFF800000> : vector<2x8xf32>
    %68 = vector.multi_reduction <maximumf>, %67, %cst_28 [2] : vector<2x8x8xf32> to vector<2x8xf32>
    %cst_29 = arith.constant 0xFF800000 : f32
    %69 = vector.broadcast %cst_29 : f32 to vector<2x8xf32>
    %70 = arith.maximumf %69, %68 : vector<2x8xf32>
    %71 = vector.shape_cast %70 : vector<2x8xf32> to vector<2x8x1xf32>
    %72 = vector.broadcast %71 : vector<2x8x1xf32> to vector<2x8x8xf32>
    %73 = arith.subf %67, %72 : vector<2x8x8xf32>
    %74 = math.exp %73 : vector<2x8x8xf32>
    %cst_30 = arith.constant dense<0.000000e+00> : vector<2x8xf32>
    %75 = vector.multi_reduction <add>, %74, %cst_30 [2] : vector<2x8x8xf32> to vector<2x8xf32>
    %76 = vector.shape_cast %75 : vector<2x8xf32> to vector<2x8x1xf32>
    %77 = vector.broadcast %76 : vector<2x8x1xf32> to vector<2x8x8xf32>
    %78 = arith.divf %74, %77 : vector<2x8x8xf32>
    "tpu.trace_start"() <{level = 10 : i32, message = "bts,bsd->btd"}> : () -> ()
    %cst_31 = arith.constant dense<0.000000e+00> : vector<2x8x32xf32>
    %79 = tpu.matmul %78, %62, %cst_31 {dimension_numbers = #tpu.dot_dimension_numbers<[2], [1], [1], [2], [0, 0, 0, 1, 1, 2], [0], [0]>} : vector<2x8x8xf32>, vector<2x8x32xf32>, vector<2x8x32xf32> -> vector<2x8x32xf32>
    "tpu.trace_stop"() : () -> ()
    %c0_32 = arith.constant 0 : index
    %c0_33 = arith.constant 0 : index
    %c32 = arith.constant 32 : index
    %80 = vector.load %arg15[%c0_32, %c0_33, %c32] : memref<2x8x64xf32, #tpu.memory_space<vmem>>, vector<2x8x32xf32>
    tpu.vector_store %arg15[%c0_32, %c0_33, %c32], %79 {strides = array<i32>} : memref<2x8x64xf32, #tpu.memory_space<vmem>>, vector<2x8x32xf32>,
    %c0_34 = arith.constant 0 : index
    %c0_35 = arith.constant 0 : index
    %c0_36 = arith.constant 0 : index
    %81 = vector.load %arg15[%c0_34, %c0_35, %c0_36] : memref<2x8x64xf32, #tpu.memory_space<vmem>>, vector<2x8x64xf32>
    %82 = arith.addf %81, %3 : vector<2x8x64xf32>
    %c0_37 = arith.constant 0 : index
    %c0_38 = arith.constant 0 : index
    %c0_39 = arith.constant 0 : index
    %83 = vector.load %arg5[%c0_37, %c0_38, %c0_39] : memref<1x1x64xf32, #tpu.memory_space<vmem>>, vector<1x1x64xf32>
    %84 = vector.shape_cast %83 : vector<1x1x64xf32> to vector<1x64xf32>
    %c0_40 = arith.constant 0 : index
    %c0_41 = arith.constant 0 : index
    %c0_42 = arith.constant 0 : index
    %85 = vector.load %arg6[%c0_40, %c0_41, %c0_42] : memref<1x1x64xf32, #tpu.memory_space<vmem>>, vector<1x1x64xf32>
    %86 = vector.shape_cast %85 : vector<1x1x64xf32> to vector<1x64xf32>
    %cst_43 = arith.constant dense<0.000000e+00> : vector<2x8xf32>
    %87 = vector.multi_reduction <add>, %82, %cst_43 [2] : vector<2x8x64xf32> to vector<2x8xf32>
    %88 = vector.shape_cast %87 : vector<2x8xf32> to vector<2x8x1xf32>
    %cst_44 = arith.constant 6.400000e+01 : f32
    %89 = vector.broadcast %cst_44 : f32 to vector<2x8x1xf32>
    %90 = arith.divf %88, %89 : vector<2x8x1xf32>
    %91 = vector.broadcast %90 : vector<2x8x1xf32> to vector<2x8x64xf32>
    %92 = arith.subf %82, %91 : vector<2x8x64xf32>
    %93 = arith.mulf %92, %92 : vector<2x8x64xf32>
    %cst_45 = arith.constant dense<0.000000e+00> : vector<2x8xf32>
    %94 = vector.multi_reduction <add>, %93, %cst_45 [2] : vector<2x8x64xf32> to vector<2x8xf32>
    %95 = vector.shape_cast %94 : vector<2x8xf32> to vector<2x8x1xf32>
    %cst_46 = arith.constant 6.400000e+01 : f32
    %96 = vector.broadcast %cst_46 : f32 to vector<2x8x1xf32>
    %97 = arith.divf %95, %96 : vector<2x8x1xf32>
    %98 = vector.broadcast %90 : vector<2x8x1xf32> to vector<2x8x64xf32>
    %99 = arith.subf %82, %98 : vector<2x8x64xf32>
    %cst_47 = arith.constant 9.99999974E-6 : f32
    %100 = vector.broadcast %cst_47 : f32 to vector<2x8x1xf32>
    %101 = arith.addf %97, %100 : vector<2x8x1xf32>
    %102 = math.rsqrt %101 : vector<2x8x1xf32>
    %103 = vector.broadcast %102 : vector<2x8x1xf32> to vector<2x8x64xf32>
    %104 = arith.mulf %99, %103 : vector<2x8x64xf32>
    %105 = vector.shape_cast %84 : vector<1x64xf32> to vector<1x1x64xf32>
    %106 = vector.broadcast %105 : vector<1x1x64xf32> to vector<2x8x64xf32>
    %107 = arith.mulf %104, %106 : vector<2x8x64xf32>
    %108 = vector.shape_cast %86 : vector<1x64xf32> to vector<1x1x64xf32>
    %109 = vector.broadcast %108 : vector<1x1x64xf32> to vector<2x8x64xf32>
    %110 = arith.addf %107, %109 : vector<2x8x64xf32>
    %c0_48 = arith.constant 0 : index
    %c0_49 = arith.constant 0 : index
    %c0_50 = arith.constant 0 : index
    %111 = vector.load %arg7[%c0_48, %c0_49, %c0_50] : memref<1x64x64xf32, #tpu.memory_space<vmem>>, vector<1x64x64xf32>
    %112 = vector.shape_cast %111 : vector<1x64x64xf32> to vector<64x64xf32>
    %cst_51 = arith.constant dense<0.000000e+00> : vector<2x8x64xf32>
    %113 = tpu.matmul %110, %112, %cst_51 {dimension_numbers = #tpu.dot_dimension_numbers<[2], [1], [0, 1], [0], [0, 0, 0, 1, 1, 0], [], []>} : vector<2x8x64xf32>, vector<64x64xf32>, vector<2x8x64xf32> -> vector<2x8x64xf32>
    %c0_52 = arith.constant 0 : index
    %c0_53 = arith.constant 0 : index
    %c0_54 = arith.constant 0 : index
    %114 = vector.load %arg8[%c0_52, %c0_53, %c0_54] : memref<1x1x64xf32, #tpu.memory_space<vmem>>, vector<1x1x64xf32>
    %115 = vector.shape_cast %114 : vector<1x1x64xf32> to vector<1x64xf32>
    %116 = vector.shape_cast %115 : vector<1x64xf32> to vector<1x1x64xf32>
    %117 = vector.broadcast %116 : vector<1x1x64xf32> to vector<2x8x64xf32>
    %118 = arith.addf %113, %117 : vector<2x8x64xf32>
    %cst_55 = arith.constant 0.000000e+00 : f32
    %119 = vector.broadcast %cst_55 : f32 to vector<2x8x64xf32>
    %120 = arith.maximumf %118, %119 : vector<2x8x64xf32>
    %c0_56 = arith.constant 0 : index
    %c0_57 = arith.constant 0 : index
    %c0_58 = arith.constant 0 : index
    %121 = vector.load %arg9[%c0_56, %c0_57, %c0_58] : memref<1x64x64xf32, #tpu.memory_space<vmem>>, vector<1x64x64xf32>
    %122 = vector.shape_cast %121 : vector<1x64x64xf32> to vector<64x64xf32>
    %cst_59 = arith.constant dense<0.000000e+00> : vector<2x8x64xf32>
    %123 = tpu.matmul %120, %122, %cst_59 {dimension_numbers = #tpu.dot_dimension_numbers<[2], [1], [0, 1], [0], [0, 0, 0, 1, 1, 0], [], []>} : vector<2x8x64xf32>, vector<64x64xf32>, vector<2x8x64xf32> -> vector<2x8x64xf32>
    %c0_60 = arith.constant 0 : index
    %c0_61 = arith.constant 0 : index
    %c0_62 = arith.constant 0 : index
    %124 = vector.load %arg10[%c0_60, %c0_61, %c0_62] : memref<1x1x64xf32, #tpu.memory_space<vmem>>, vector<1x1x64xf32>
    %125 = vector.shape_cast %124 : vector<1x1x64xf32> to vector<1x64xf32>
    %126 = vector.shape_cast %125 : vector<1x64xf32> to vector<1x1x64xf32>
    %127 = vector.broadcast %126 : vector<1x1x64xf32> to vector<2x8x64xf32>
    %128 = arith.addf %123, %127 : vector<2x8x64xf32>
    %cst_63 = arith.constant 0.000000e+00 : f32
    %129 = vector.broadcast %cst_63 : f32 to vector<2x8x64xf32>
    %130 = arith.maximumf %128, %129 : vector<2x8x64xf32>
    %131 = arith.addf %130, %82 : vector<2x8x64xf32>
    %c0_64 = arith.constant 0 : index
    %c0_65 = arith.constant 0 : index
    %c0_66 = arith.constant 0 : index
    %132 = vector.load %arg14[%c0_64, %c0_65, %c0_66] : memref<2x8x64xf32, #tpu.memory_space<vmem>>, vector<2x8x64xf32>
    tpu.vector_store %arg14[%c0_64, %c0_65, %c0_66], %131 {strides = array<i32>} : memref<2x8x64xf32, #tpu.memory_space<vmem>>, vector<2x8x64xf32>,
    %c1_i32 = arith.constant 1 : i32
    %133 = arith.cmpi eq, %arg0, %c1_i32 : i32
    %134 = arith.extui %133 : i1 to i32
    %c0_i32_67 = arith.constant 0 : i32
    %135 = arith.cmpi ne, %134, %c0_i32_67 : i32
    scf.if %135 {
      %c0_68 = arith.constant 0 : index
      %c0_69 = arith.constant 0 : index
      %136 = vector.load %arg11[%c0_68, %c0_69] : memref<128x64xf32, #tpu.memory_space<vmem>>, vector<128x64xf32>
      %cst_70 = arith.constant dense<0.000000e+00> : vector<2x8x128xf32>
      %137 = tpu.matmul %131, %136, %cst_70 {dimension_numbers = #tpu.dot_dimension_numbers<[2], [1], [0, 1], [0], [0, 0, 0, 1, 1, 0], [], []>} : vector<2x8x64xf32>, vector<128x64xf32>, vector<2x8x128xf32> -> vector<2x8x128xf32>
      %c0_71 = arith.constant 0 : index
      %c0_72 = arith.constant 0 : index
      %138 = vector.load %arg12[%c0_71, %c0_72] : memref<1x128xf32, #tpu.memory_space<vmem>>, vector<1x128xf32>
      %139 = vector.shape_cast %138 : vector<1x128xf32> to vector<1x1x128xf32>
      %140 = vector.broadcast %139 : vector<1x1x128xf32> to vector<2x8x128xf32>
      %141 = arith.addf %137, %140 : vector<2x8x128xf32>
      %c0_73 = arith.constant 0 : index
      %c0_74 = arith.constant 0 : index
      %c0_75 = arith.constant 0 : index
      %142 = vector.load %arg13[%c0_73, %c0_74, %c0_75] : memref<2x8x128xf32, #tpu.memory_space<vmem>>, vector<2x8x128xf32>
      tpu.vector_store %arg13[%c0_73, %c0_74, %c0_75], %141 {strides = array<i32>} : memref<2x8x128xf32, #tpu.memory_space<vmem>>, vector<2x8x128xf32>,
    } else {
    }
    return
  }
  func.func @transform_0(%arg0: i32) -> (i32, i32, i32) {
    %c0_i32 = arith.constant 0 : i32
    %c0_i32_0 = arith.constant 0 : i32
    %c0_i32_1 = arith.constant 0 : i32
    %c0_i32_2 = arith.constant 0 : i32
    return %c0_i32, %c0_i32_0, %c0_i32_1 : i32, i32, i32
  }
  func.func @transform_1(%arg0: i32) -> (i32, i32, i32) {
    %c0_i32 = arith.constant 0 : i32
    %c0_i32_0 = arith.constant 0 : i32
    %c0_i32_1 = arith.constant 0 : i32
    return %arg0, %c0_i32, %c0_i32_0 : i32, i32, i32
  }
  func.func @transform_2(%arg0: i32) -> (i32, i32, i32) {
    %c0_i32 = arith.constant 0 : i32
    %c0_i32_0 = arith.constant 0 : i32
    %c0_i32_1 = arith.constant 0 : i32
    return %arg0, %c0_i32, %c0_i32_0 : i32, i32, i32
  }
  func.func @transform_3(%arg0: i32) -> (i32, i32, i32) {
    %c0_i32 = arith.constant 0 : i32
    %c0_i32_0 = arith.constant 0 : i32
    %c0_i32_1 = arith.constant 0 : i32
    return %arg0, %c0_i32, %c0_i32_0 : i32, i32, i32
  }
  func.func @transform_4(%arg0: i32) -> (i32, i32, i32) {
    %c0_i32 = arith.constant 0 : i32
    %c0_i32_0 = arith.constant 0 : i32
    %c0_i32_1 = arith.constant 0 : i32
    return %arg0, %c0_i32, %c0_i32_0 : i32, i32, i32
  }
  func.func @transform_5(%arg0: i32) -> (i32, i32, i32) {
    %c0_i32 = arith.constant 0 : i32
    %c0_i32_0 = arith.constant 0 : i32
    %c0_i32_1 = arith.constant 0 : i32
    return %arg0, %c0_i32, %c0_i32_0 : i32, i32, i32
  }
  func.func @transform_6(%arg0: i32) -> (i32, i32, i32) {
    %c0_i32 = arith.constant 0 : i32
    %c0_i32_0 = arith.constant 0 : i32
    %c0_i32_1 = arith.constant 0 : i32
    return %arg0, %c0_i32, %c0_i32_0 : i32, i32, i32
  }
  func.func @transform_7(%arg0: i32) -> (i32, i32, i32) {
    %c0_i32 = arith.constant 0 : i32
    %c0_i32_0 = arith.constant 0 : i32
    %c0_i32_1 = arith.constant 0 : i32
    return %arg0, %c0_i32, %c0_i32_0 : i32, i32, i32
  }
  func.func @transform_8(%arg0: i32) -> (i32, i32, i32) {
    %c0_i32 = arith.constant 0 : i32
    %c0_i32_0 = arith.constant 0 : i32
    %c0_i32_1 = arith.constant 0 : i32
    return %arg0, %c0_i32, %c0_i32_0 : i32, i32, i32
  }
  func.func @transform_9(%arg0: i32) -> (i32, i32, i32) {
    %c0_i32 = arith.constant 0 : i32
    %c0_i32_0 = arith.constant 0 : i32
    %c0_i32_1 = arith.constant 0 : i32
    return %arg0, %c0_i32, %c0_i32_0 : i32, i32, i32
  }
  func.func @transform_10(%arg0: i32) -> (i32, i32) {
    %c0_i32 = arith.constant 0 : i32
    %c0_i32_0 = arith.constant 0 : i32
    %c0_i32_1 = arith.constant 0 : i32
    return %c0_i32, %c0_i32_0 : i32, i32
  }
  func.func @transform_11(%arg0: i32) -> (i32, i32) {
    %c0_i32 = arith.constant 0 : i32
    %c0_i32_0 = arith.constant 0 : i32
    %c0_i32_1 = arith.constant 0 : i32
    return %c0_i32, %c0_i32_0 : i32, i32
  }
  func.func @transform_12(%arg0: i32) -> (i32, i32, i32) {
    %c0_i32 = arith.constant 0 : i32
    %c0_i32_0 = arith.constant 0 : i32
    %c0_i32_1 = arith.constant 0 : i32
    %c0_i32_2 = arith.constant 0 : i32
    return %c0_i32, %c0_i32_0, %c0_i32_1 : i32, i32, i32
  }
}

</mosaic_0001>

<llo_original>
// kernel: gpt_forward.1
$region0: #{gpt_forward.1}
  #allocation0 [shape = 'u32[]', space=smem, size = 0x4, offset = 0x4, fixed_abs, tag = 'smem constant byte address 0x4 - core index']
  #allocation1 [shape = 'u32[144,128]{1,0:T(1,128)}', space=vmem, size = 0x12000, scoped, tag = 'internal scratch']
  #allocation2 [shape = 'f32[2,8,64]{2,1,0:T(8,128)}', space=vmem, size = 0x2000, scoped, tag = 'scratch operand']
  #allocation3 [shape = 'f32[2,8,64]{2,1,0:T(8,128)}', space=vmem, size = 0x2000, scoped, tag = 'scratch operand']
  %s0 = inlined_call_operand.vmem [shape: f32[2,8,64], index: 0, kind: input, shape index: {}]
  %s1 = inlined_call_operand.vmem [shape: f32[2,1,64], index: 1, kind: input, shape index: {}]
  %s2 = inlined_call_operand.vmem [shape: f32[2,1,64], index: 2, kind: input, shape index: {}]
  %s3 = inlined_call_operand.vmem [shape: f32[2,192,64], index: 3, kind: input, shape index: {}]
  %s4 = inlined_call_operand.vmem [shape: f32[2,1,64], index: 4, kind: input, shape index: {}]
  %s5 = inlined_call_operand.vmem [shape: f32[2,1,64], index: 5, kind: input, shape index: {}]
  %s6 = inlined_call_operand.vmem [shape: f32[2,64,64], index: 6, kind: input, shape index: {}]
  %s7 = inlined_call_operand.vmem [shape: f32[2,1,64], index: 7, kind: input, shape index: {}]
  %s8 = inlined_call_operand.vmem [shape: f32[2,64,64], index: 8, kind: input, shape index: {}]
  %s9 = inlined_call_operand.vmem [shape: f32[2,1,64], index: 9, kind: input, shape index: {}]
  %s10 = inlined_call_operand.vmem [shape: f32[128,64], index: 10, kind: input, shape index: {}]
  %s11 = inlined_call_operand.vmem [shape: f32[1,128], index: 11, kind: input, shape index: {}]
  %s12 = inlined_call_operand.hbm [shape: f32[2,8,128], index: 12, kind: output, shape index: {}]
  %s13 = sld [smem:[#allocation0]]
  $region89: #{gpt_forward.1} parent=0
    _
  %s15 = ssub.s32 1, %s13
  %s16 = scalar_select 0, %s15, %s13
  $region1: #{gpt_forward.1} parent=0
    #allocation4 [shape = 'u8[8192]{0}', space=vmem, size = 0x2000, scoped, tag = 'output window, operand 0, single buffered']
    #allocation5 [shape = 's32[2]{0}', space=sflag, size = 0x8, scoped, tag = 'scoped memory for gpt_forward.1']
    %17 = vsyncpa [#allocation5], 0
    loop: start=0, step=1, limit=4
    $region2: #{gpt_forward.1} parent=1 // loop_pre_header
      _
    $region3: #{gpt_forward.1} parent=1 // loop_header
      %s19 = sphi 0, %s23
      %p20 = scmp.ge.s32.totalorder %s19, 4
      %s27 = sphi 0, %s27
      %s29 = sphi 0, %s27
      %s30 = sphi 0, %s29
      %s44 = sphi 0, %s30
      %s50 = sphi 0, %s52
      %s53 = sphi 0, %s50
      %s54 = sphi 0, %s53
      %s70 = sphi 0, %s54
      %s76 = sphi 0, %s78
      %s79 = sphi 0, %s76
      %s80 = sphi 0, %s79
      %s96 = sphi 0, %s80
      %s102 = sphi 0, %s104
      %s105 = sphi 0, %s102
      %s106 = sphi 0, %s105
      %s122 = sphi 0, %s106
      %s128 = sphi 0, %s130
      %s131 = sphi 0, %s128
      %s132 = sphi 0, %s131
      %s148 = sphi 0, %s132
      %s154 = sphi 0, %s156
      %s157 = sphi 0, %s154
      %s158 = sphi 0, %s157
      %s174 = sphi 0, %s158
      %s180 = sphi 0, %s182
      %s183 = sphi 0, %s180
      %s184 = sphi 0, %s183
      %s200 = sphi 0, %s184
      %s206 = sphi 0, %s208
      %s209 = sphi 0, %s206
      %s210 = sphi 0, %s209
      %s226 = sphi 0, %s210
      %s232 = sphi 0, %s234
      %s235 = sphi 0, %s232
      %s236 = sphi 0, %s235
      %s252 = sphi 0, %s236
      %s258 = sphi 0, %s260
      %s261 = sphi 0, %s258
      %s262 = sphi 0, %s261
      %s278 = sphi 0, %s262
      %s282 = sphi 0, %s282
      %s284 = sphi 0, %s282
      %s285 = sphi 0, %s284
      %s299 = sphi 0, %s285
      %s303 = sphi 0, %s303
      %s305 = sphi 0, %s303
      %s306 = sphi 0, %s305
      %s320 = sphi 0, %s306
      %s324 = sphi 0, %s324
      %s326 = sphi 0, %s324
      %s327 = sphi 0, %s326
      %s341 = sphi 0, %s327
    $region4: #{gpt_forward.1} parent=1 // loop_header_branch
      %22 = sbr.rel (%p20) target = $region8
    $region5: #{gpt_forward.1} parent=1 // loop_body
      %s24 = ssub.s32 %s19, 1
      %s25 = ssub.s32 %s19, 2
      %s26 = sadd.s32 %s19, 1
      %s28 = sadd.s32 %s27, 1
      %p31 = scmp.eq.s32.totalorder %s19, 1
      %p32 = scmp.ne.s32.totalorder %s27, %s29
      %p33 = scmp.eq.s32.totalorder %s19, 0
      %p34 = por %p32, %p33
      %p35 = scmp.ne.s32.totalorder %s27, %s29
      %p36 = scmp.eq.s32.totalorder %s24, 1
      %p37 = por %p35, %p36
      %p38 = scmp.ne.s32.totalorder %s29, %s30
      %p39 = scmp.eq.s32.totalorder %s24, 0
      %p40 = por %p38, %p39
      %p41 = scmp.ne.s32.totalorder %s29, %s30
      %p42 = scmp.eq.s32.totalorder %s25, 1
      %p43 = por %p41, %p42
      %p45 = scmp.ne.s32.totalorder %s30, %s44
      %p46 = scmp.eq.s32.totalorder %s25, 0
      %p47 = por %p45, %p46
      %s48 = ssub.s32 %s19, %s26
      %p49 = scmp.eq.s32.totalorder %s48, 0
      %s51 = sadd.s32 %s50, 1
      %s52 = scalar_select %p49, %s50, %s51
      %p55 = pneg %p49
      %p56 = scmp.eq.s32.totalorder %s19, 1
      %p57 = por %p55, %p56
      %p58 = scmp.ne.s32.totalorder %s50, %s53
      %p59 = scmp.eq.s32.totalorder %s19, 0
      %p60 = por %p58, %p59
      %p61 = scmp.ne.s32.totalorder %s50, %s53
      %p62 = scmp.eq.s32.totalorder %s24, 1
      %p63 = por %p61, %p62
      %p64 = scmp.ne.s32.totalorder %s53, %s54
      %p65 = scmp.eq.s32.totalorder %s24, 0
      %p66 = por %p64, %p65
      %p67 = scmp.ne.s32.totalorder %s53, %s54
      %p68 = scmp.eq.s32.totalorder %s25, 1
      %p69 = por %p67, %p68
      %p71 = scmp.ne.s32.totalorder %s54, %s70
      %p72 = scmp.eq.s32.totalorder %s25, 0
      %p73 = por %p71, %p72
      %s74 = ssub.s32 %s19, %s26
      %p75 = scmp.eq.s32.totalorder %s74, 0
      %s77 = sadd.s32 %s76, 1
      %s78 = scalar_select %p75, %s76, %s77
      %p81 = pneg %p75
      %p82 = scmp.eq.s32.totalorder %s19, 1
      %p83 = por %p81, %p82
      %p84 = scmp.ne.s32.totalorder %s76, %s79
      %p85 = scmp.eq.s32.totalorder %s19, 0
      %p86 = por %p84, %p85
      %p87 = scmp.ne.s32.totalorder %s76, %s79
      %p88 = scmp.eq.s32.totalorder %s24, 1
      %p89 = por %p87, %p88
      %p90 = scmp.ne.s32.totalorder %s79, %s80
      %p91 = scmp.eq.s32.totalorder %s24, 0
      %p92 = por %p90, %p91
      %p93 = scmp.ne.s32.totalorder %s79, %s80
      %p94 = scmp.eq.s32.totalorder %s25, 1
      %p95 = por %p93, %p94
      %p97 = scmp.ne.s32.totalorder %s80, %s96
      %p98 = scmp.eq.s32.totalorder %s25, 0
      %p99 = por %p97, %p98
      %s100 = ssub.s32 %s19, %s26
      %p101 = scmp.eq.s32.totalorder %s100, 0
      %s103 = sadd.s32 %s102, 1
      %s104 = scalar_select %p101, %s102, %s103
      %p107 = pneg %p101
      %p108 = scmp.eq.s32.totalorder %s19, 1
      %p109 = por %p107, %p108
      %p110 = scmp.ne.s32.totalorder %s102, %s105
      %p111 = scmp.eq.s32.totalorder %s19, 0
      %p112 = por %p110, %p111
      %p113 = scmp.ne.s32.totalorder %s102, %s105
      %p114 = scmp.eq.s32.totalorder %s24, 1
      %p115 = por %p113, %p114
      %p116 = scmp.ne.s32.totalorder %s105, %s106
      %p117 = scmp.eq.s32.totalorder %s24, 0
      %p118 = por %p116, %p117
      %p119 = scmp.ne.s32.totalorder %s105, %s106
      %p120 = scmp.eq.s32.totalorder %s25, 1
      %p121 = por %p119, %p120
      %p123 = scmp.ne.s32.totalorder %s106, %s122
      %p124 = scmp.eq.s32.totalorder %s25, 0
      %p125 = por %p123, %p124
      %s126 = ssub.s32 %s19, %s26
      %p127 = scmp.eq.s32.totalorder %s126, 0
      %s129 = sadd.s32 %s128, 1
      %s130 = scalar_select %p127, %s128, %s129
      %p133 = pneg %p127
      %p134 = scmp.eq.s32.totalorder %s19, 1
      %p135 = por %p133, %p134
      %p136 = scmp.ne.s32.totalorder %s128, %s131
      %p137 = scmp.eq.s32.totalorder %s19, 0
      %p138 = por %p136, %p137
      %p139 = scmp.ne.s32.totalorder %s128, %s131
      %p140 = scmp.eq.s32.totalorder %s24, 1
      %p141 = por %p139, %p140
      %p142 = scmp.ne.s32.totalorder %s131, %s132
      %p143 = scmp.eq.s32.totalorder %s24, 0
      %p144 = por %p142, %p143
      %p145 = scmp.ne.s32.totalorder %s131, %s132
      %p146 = scmp.eq.s32.totalorder %s25, 1
      %p147 = por %p145, %p146
      %p149 = scmp.ne.s32.totalorder %s132, %s148
      %p150 = scmp.eq.s32.totalorder %s25, 0
      %p151 = por %p149, %p150
      %s152 = ssub.s32 %s19, %s26
      %p153 = scmp.eq.s32.totalorder %s152, 0
      %s155 = sadd.s32 %s154, 1
      %s156 = scalar_select %p153, %s154, %s155
      %p159 = pneg %p153
      %p160 = scmp.eq.s32.totalorder %s19, 1
      %p161 = por %p159, %p160
      %p162 = scmp.ne.s32.totalorder %s154, %s157
      %p163 = scmp.eq.s32.totalorder %s19, 0
      %p164 = por %p162, %p163
      %p165 = scmp.ne.s32.totalorder %s154, %s157
      %p166 = scmp.eq.s32.totalorder %s24, 1
      %p167 = por %p165, %p166
      %p168 = scmp.ne.s32.totalorder %s157, %s158
      %p169 = scmp.eq.s32.totalorder %s24, 0
      %p170 = por %p168, %p169
      %p171 = scmp.ne.s32.totalorder %s157, %s158
      %p172 = scmp.eq.s32.totalorder %s25, 1
      %p173 = por %p171, %p172
      %p175 = scmp.ne.s32.totalorder %s158, %s174
      %p176 = scmp.eq.s32.totalorder %s25, 0
      %p177 = por %p175, %p176
      %s178 = ssub.s32 %s19, %s26
      %p179 = scmp.eq.s32.totalorder %s178, 0
      %s181 = sadd.s32 %s180, 1
      %s182 = scalar_select %p179, %s180, %s181
      %p185 = pneg %p179
      %p186 = scmp.eq.s32.totalorder %s19, 1
      %p187 = por %p185, %p186
      %p188 = scmp.ne.s32.totalorder %s180, %s183
      %p189 = scmp.eq.s32.totalorder %s19, 0
      %p190 = por %p188, %p189
      %p191 = scmp.ne.s32.totalorder %s180, %s183
      %p192 = scmp.eq.s32.totalorder %s24, 1
      %p193 = por %p191, %p192
      %p194 = scmp.ne.s32.totalorder %s183, %s184
      %p195 = scmp.eq.s32.totalorder %s24, 0
      %p196 = por %p194, %p195
      %p197 = scmp.ne.s32.totalorder %s183, %s184
      %p198 = scmp.eq.s32.totalorder %s25, 1
      %p199 = por %p197, %p198
      %p201 = scmp.ne.s32.totalorder %s184, %s200
      %p202 = scmp.eq.s32.totalorder %s25, 0
      %p203 = por %p201, %p202
      %s204 = ssub.s32 %s19, %s26
      %p205 = scmp.eq.s32.totalorder %s204, 0
      %s207 = sadd.s32 %s206, 1
      %s208 = scalar_select %p205, %s206, %s207
      %p211 = pneg %p205
      %p212 = scmp.eq.s32.totalorder %s19, 1
      %p213 = por %p211, %p212
      %p214 = scmp.ne.s32.totalorder %s206, %s209
      %p215 = scmp.eq.s32.totalorder %s19, 0
      %p216 = por %p214, %p215
      %p217 = scmp.ne.s32.totalorder %s206, %s209
      %p218 = scmp.eq.s32.totalorder %s24, 1
      %p219 = por %p217, %p218
      %p220 = scmp.ne.s32.totalorder %s209, %s210
      %p221 = scmp.eq.s32.totalorder %s24, 0
      %p222 = por %p220, %p221
      %p223 = scmp.ne.s32.totalorder %s209, %s210
      %p224 = scmp.eq.s32.totalorder %s25, 1
      %p225 = por %p223, %p224
      %p227 = scmp.ne.s32.totalorder %s210, %s226
      %p228 = scmp.eq.s32.totalorder %s25, 0
      %p229 = por %p227, %p228
      %s230 = ssub.s32 %s19, %s26
      %p231 = scmp.eq.s32.totalorder %s230, 0
      %s233 = sadd.s32 %s232, 1
      %s234 = scalar_select %p231, %s232, %s233
      %p237 = pneg %p231
      %p238 = scmp.eq.s32.totalorder %s19, 1
      %p239 = por %p237, %p238
      %p240 = scmp.ne.s32.totalorder %s232, %s235
      %p241 = scmp.eq.s32.totalorder %s19, 0
      %p242 = por %p240, %p241
      %p243 = scmp.ne.s32.totalorder %s232, %s235
      %p244 = scmp.eq.s32.totalorder %s24, 1
      %p245 = por %p243, %p244
      %p246 = scmp.ne.s32.totalorder %s235, %s236
      %p247 = scmp.eq.s32.totalorder %s24, 0
      %p248 = por %p246, %p247
      %p249 = scmp.ne.s32.totalorder %s235, %s236
      %p250 = scmp.eq.s32.totalorder %s25, 1
      %p251 = por %p249, %p250
      %p253 = scmp.ne.s32.totalorder %s236, %s252
      %p254 = scmp.eq.s32.totalorder %s25, 0
      %p255 = por %p253, %p254
      %s256 = ssub.s32 %s19, %s26
      %p257 = scmp.eq.s32.totalorder %s256, 0
      %s259 = sadd.s32 %s258, 1
      %s260 = scalar_select %p257, %s258, %s259
      %p263 = pneg %p257
      %p264 = scmp.eq.s32.totalorder %s19, 1
      %p265 = por %p263, %p264
      %p266 = scmp.ne.s32.totalorder %s258, %s261
      %p267 = scmp.eq.s32.totalorder %s19, 0
      %p268 = por %p266, %p267
      %p269 = scmp.ne.s32.totalorder %s258, %s261
      %p270 = scmp.eq.s32.totalorder %s24, 1
      %p271 = por %p269, %p270
      %p272 = scmp.ne.s32.totalorder %s261, %s262
      %p273 = scmp.eq.s32.totalorder %s24, 0
      %p274 = por %p272, %p273
      %p275 = scmp.ne.s32.totalorder %s261, %s262
      %p276 = scmp.eq.s32.totalorder %s25, 1
      %p277 = por %p275, %p276
      %p279 = scmp.ne.s32.totalorder %s262, %s278
      %p280 = scmp.eq.s32.totalorder %s25, 0
      %p281 = por %p279, %p280
      %s283 = sadd.s32 %s282, 1
      %p286 = scmp.eq.s32.totalorder %s19, 1
      %p287 = scmp.ne.s32.totalorder %s282, %s284
      %p288 = scmp.eq.s32.totalorder %s19, 0
      %p289 = por %p287, %p288
      %p290 = scmp.ne.s32.totalorder %s282, %s284
      %p291 = scmp.eq.s32.totalorder %s24, 1
      %p292 = por %p290, %p291
      %p293 = scmp.ne.s32.totalorder %s284, %s285
      %p294 = scmp.eq.s32.totalorder %s24, 0
      %p295 = por %p293, %p294
      %p296 = scmp.ne.s32.totalorder %s284, %s285
      %p297 = scmp.eq.s32.totalorder %s25, 1
      %p298 = por %p296, %p297
      %p300 = scmp.ne.s32.totalorder %s285, %s299
      %p301 = scmp.eq.s32.totalorder %s25, 0
      %p302 = por %p300, %p301
      %s304 = sadd.s32 %s303, 1
      %p307 = scmp.eq.s32.totalorder %s19, 1
      %p308 = scmp.ne.s32.totalorder %s303, %s305
      %p309 = scmp.eq.s32.totalorder %s19, 0
      %p310 = por %p308, %p309
      %p311 = scmp.ne.s32.totalorder %s303, %s305
      %p312 = scmp.eq.s32.totalorder %s24, 1
      %p313 = por %p311, %p312
      %p314 = scmp.ne.s32.totalorder %s305, %s306
      %p315 = scmp.eq.s32.totalorder %s24, 0
      %p316 = por %p314, %p315
      %p317 = scmp.ne.s32.totalorder %s305, %s306
      %p318 = scmp.eq.s32.totalorder %s25, 1
      %p319 = por %p317, %p318
      %p321 = scmp.ne.s32.totalorder %s306, %s320
      %p322 = scmp.eq.s32.totalorder %s25, 0
      %p323 = por %p321, %p322
      %s325 = sadd.s32 %s324, 1
      %p328 = scmp.eq.s32.totalorder %s19, 1
      %p329 = scmp.ne.s32.totalorder %s324, %s326
      %p330 = scmp.eq.s32.totalorder %s19, 0
      %p331 = por %p329, %p330
      %p332 = scmp.ne.s32.totalorder %s324, %s326
      %p333 = scmp.eq.s32.totalorder %s24, 1
      %p334 = por %p332, %p333
      %p335 = scmp.ne.s32.totalorder %s326, %s327
      %p336 = scmp.eq.s32.totalorder %s24, 0
      %p337 = por %p335, %p336
      %p338 = scmp.ne.s32.totalorder %s326, %s327
      %p339 = scmp.eq.s32.totalorder %s25, 1
      %p340 = por %p338, %p339
      %p342 = scmp.ne.s32.totalorder %s327, %s341
      %p343 = scmp.eq.s32.totalorder %s25, 0
      %p344 = por %p342, %p343
      %p345 = scmp.le.s32.totalorder 1, %s19
      %p346 = scmp.lt.s32.totalorder %s19, 3
      %p347 = pnand %p345, %p346
      %p348 = pneg %p347
      // Predicated region
      $region9: #{gpt_forward.1} parent=5 // pred_check
        _
      $region10: #{gpt_forward.1} parent=5 // pred_check_branch
        %350 = sbr.rel (%p347) target = $region12
      $region11: #{gpt_forward.1} parent=5 // pred_region
        %s351 = ssub.s32 %s19, 1
        // Predicated region
        $region13: #{gpt_forward.1} parent=11 // pred_check
          %p352 = pneg %p40
        $region14: #{gpt_forward.1} parent=11 // pred_check_branch
          %354 = sbr.rel (%p352) target = $region16
        $region15: #{gpt_forward.1} parent=11 // pred_region
          _
        $region16: #{gpt_forward.1} parent=11 // pred_fallthru
          _
        // Predicated region
        $region17: #{gpt_forward.1} parent=11 // pred_check
          %p355 = pneg %p295
        $region18: #{gpt_forward.1} parent=11 // pred_check_branch
          %357 = sbr.rel (%p355) target = $region20
        $region19: #{gpt_forward.1} parent=11 // pred_region
          _
        $region20: #{gpt_forward.1} parent=11 // pred_fallthru
          _
        // Predicated region
        $region21: #{gpt_forward.1} parent=11 // pred_check
          %p358 = pneg %p316
        $region22: #{gpt_forward.1} parent=11 // pred_check_branch
          %360 = sbr.rel (%p358) target = $region24
        $region23: #{gpt_forward.1} parent=11 // pred_region
          _
        $region24: #{gpt_forward.1} parent=11 // pred_fallthru
          _
      $region12: #{gpt_forward.1} parent=5 // pred_fallthru
        _
      %p361 = scmp.lt.s32.totalorder %s19, 2
      // Predicated region
      $region25: #{gpt_forward.1} parent=5 // pred_check
        %p362 = pneg %p361
      $region26: #{gpt_forward.1} parent=5 // pred_check_branch
        %364 = sbr.rel (%p362) target = $region28
      $region27: #{gpt_forward.1} parent=5 // pred_region
        // Predicated region
        $region29: #{gpt_forward.1} parent=27 // pred_check
          %p365 = pneg %p60
        $region30: #{gpt_forward.1} parent=27 // pred_check_branch
          %367 = sbr.rel (%p365) target = $region32
        $region31: #{gpt_forward.1} parent=27 // pred_region
          %p368 = scmp.lt.s32.totalorder %s19, 1
          %s369 = scalar_select %p368, %s19, 1
          %s370 = scalar_lea.vmem %s1, %s369
        $region32: #{gpt_forward.1} parent=27 // pred_fallthru
          _
        // Predicated region
        $region33: #{gpt_forward.1} parent=27 // pred_check
          %p371 = pneg %p86
        $region34: #{gpt_forward.1} parent=27 // pred_check_branch
          %373 = sbr.rel (%p371) target = $region36
        $region35: #{gpt_forward.1} parent=27 // pred_region
          %p374 = scmp.lt.s32.totalorder %s19, 1
          %s375 = scalar_select %p374, %s19, 1
          %s376 = scalar_lea.vmem %s2, %s375
        $region36: #{gpt_forward.1} parent=27 // pred_fallthru
          _
        // Predicated region
        $region37: #{gpt_forward.1} parent=27 // pred_check
          %p377 = pneg %p112
        $region38: #{gpt_forward.1} parent=27 // pred_check_branch
          %379 = sbr.rel (%p377) target = $region40
        $region39: #{gpt_forward.1} parent=27 // pred_region
          %p380 = scmp.lt.s32.totalorder %s19, 1
          %s381 = scalar_select %p380, %s19, 1
          %s382 = smul.addr %s381, 24
          %s383 = smul.addr %s382, 8
          %s384 = scalar_lea.vmem %s3, %s383
        $region40: #{gpt_forward.1} parent=27 // pred_fallthru
          _
        // Predicated region
        $region41: #{gpt_forward.1} parent=27 // pred_check
          %p385 = pneg %p138
        $region42: #{gpt_forward.1} parent=27 // pred_check_branch
          %387 = sbr.rel (%p385) target = $region44
        $region43: #{gpt_forward.1} parent=27 // pred_region
          %p388 = scmp.lt.s32.totalorder %s19, 1
          %s389 = scalar_select %p388, %s19, 1
          %s390 = scalar_lea.vmem %s4, %s389
        $region44: #{gpt_forward.1} parent=27 // pred_fallthru
          _
        // Predicated region
        $region45: #{gpt_forward.1} parent=27 // pred_check
          %p391 = pneg %p164
        $region46: #{gpt_forward.1} parent=27 // pred_check_branch
          %393 = sbr.rel (%p391) target = $region48
        $region47: #{gpt_forward.1} parent=27 // pred_region
          %p394 = scmp.lt.s32.totalorder %s19, 1
          %s395 = scalar_select %p394, %s19, 1
          %s396 = scalar_lea.vmem %s5, %s395
        $region48: #{gpt_forward.1} parent=27 // pred_fallthru
          _
        // Predicated region
        $region49: #{gpt_forward.1} parent=27 // pred_check
          %p397 = pneg %p190
        $region50: #{gpt_forward.1} parent=27 // pred_check_branch
          %399 = sbr.rel (%p397) target = $region52
        $region51: #{gpt_forward.1} parent=27 // pred_region
          %p400 = scmp.lt.s32.totalorder %s19, 1
          %s401 = scalar_select %p400, %s19, 1
          %s402 = smul.addr %s401, 8
          %s403 = smul.addr %s402, 8
          %s404 = scalar_lea.vmem %s6, %s403
        $region52: #{gpt_forward.1} parent=27 // pred_fallthru
          _
        // Predicated region
        $region53: #{gpt_forward.1} parent=27 // pred_check
          %p405 = pneg %p216
        $region54: #{gpt_forward.1} parent=27 // pred_check_branch
          %407 = sbr.rel (%p405) target = $region56
        $region55: #{gpt_forward.1} parent=27 // pred_region
          %p408 = scmp.lt.s32.totalorder %s19, 1
          %s409 = scalar_select %p408, %s19, 1
          %s410 = scalar_lea.vmem %s7, %s409
        $region56: #{gpt_forward.1} parent=27 // pred_fallthru
          _
        // Predicated region
        $region57: #{gpt_forward.1} parent=27 // pred_check
          %p411 = pneg %p242
        $region58: #{gpt_forward.1} parent=27 // pred_check_branch
          %413 = sbr.rel (%p411) target = $region60
        $region59: #{gpt_forward.1} parent=27 // pred_region
          %p414 = scmp.lt.s32.totalorder %s19, 1
          %s415 = scalar_select %p414, %s19, 1
          %s416 = smul.addr %s415, 8
          %s417 = smul.addr %s416, 8
          %s418 = scalar_lea.vmem %s8, %s417
        $region60: #{gpt_forward.1} parent=27 // pred_fallthru
          _
        // Predicated region
        $region61: #{gpt_forward.1} parent=27 // pred_check
          %p419 = pneg %p268
        $region62: #{gpt_forward.1} parent=27 // pred_check_branch
          %421 = sbr.rel (%p419) target = $region64
        $region63: #{gpt_forward.1} parent=27 // pred_region
          %p422 = scmp.lt.s32.totalorder %s19, 1
          %s423 = scalar_select %p422, %s19, 1
          %s424 = scalar_lea.vmem %s9, %s423
        $region64: #{gpt_forward.1} parent=27 // pred_fallthru
          _
      $region28: #{gpt_forward.1} parent=5 // pred_fallthru
        _
      %p425 = scmp.le.s32.totalorder 1, %s19
      %p426 = scmp.lt.s32.totalorder %s19, 3
      %p427 = pnand %p425, %p426
      %p428 = pneg %p427
      // Predicated region
      $region65: #{gpt_forward.1} parent=5 // pred_check
        _
      $region66: #{gpt_forward.1} parent=5 // pred_check_branch
        %430 = sbr.rel (%p427) target = $region68
      $region67: #{gpt_forward.1} parent=5 // pred_region
        %s431 = ssub.s32 %s19, 1
        %p432 = pneg %p40
        %p433 = pneg %p37
        %p434 = scmp.lt.s32.totalorder %s24, 1
        %s435 = scalar_select %p434, %s24, 1
        %s436 = scalar_lea.vmem %s1, %s435
        %p437 = pneg %p66
        %p438 = pneg %p63
        %p439 = scmp.lt.s32.totalorder %s24, 1
        %s440 = scalar_select %p439, %s24, 1
        %s441 = scalar_lea.vmem %s2, %s440
        %p442 = pneg %p92
        %p443 = pneg %p89
        %p444 = scmp.lt.s32.totalorder %s24, 1
        %s445 = scalar_select %p444, %s24, 1
        %s446 = smul.addr %s445, 24
        %s447 = smul.addr %s446, 8
        %s448 = scalar_lea.vmem %s3, %s447
        %p449 = pneg %p118
        %p450 = pneg %p115
        %p451 = scmp.lt.s32.totalorder %s24, 1
        %s452 = scalar_select %p451, %s24, 1
        %s453 = scalar_lea.vmem %s4, %s452
        %p454 = pneg %p144
        %p455 = pneg %p141
        %p456 = scmp.lt.s32.totalorder %s24, 1
        %s457 = scalar_select %p456, %s24, 1
        %s458 = scalar_lea.vmem %s5, %s457
        %p459 = pneg %p170
        %p460 = pneg %p167
        %p461 = scmp.lt.s32.totalorder %s24, 1
        %s462 = scalar_select %p461, %s24, 1
        %s463 = smul.addr %s462, 8
        %s464 = smul.addr %s463, 8
        %s465 = scalar_lea.vmem %s6, %s464
        %p466 = pneg %p196
        %p467 = pneg %p193
        %p468 = scmp.lt.s32.totalorder %s24, 1
        %s469 = scalar_select %p468, %s24, 1
        %s470 = scalar_lea.vmem %s7, %s469
        %p471 = pneg %p222
        %p472 = pneg %p219
        %p473 = scmp.lt.s32.totalorder %s24, 1
        %s474 = scalar_select %p473, %s24, 1
        %s475 = smul.addr %s474, 8
        %s476 = smul.addr %s475, 8
        %s477 = scalar_lea.vmem %s8, %s476
        %p478 = pneg %p248
        %p479 = pneg %p245
        %p480 = scmp.lt.s32.totalorder %s24, 1
        %s481 = scalar_select %p480, %s24, 1
        %s482 = scalar_lea.vmem %s9, %s481
        %p483 = pneg %p274
        %p484 = pneg %p271
        %p485 = pneg %p295
        %p486 = pneg %p292
        %p487 = pneg %p316
        %p488 = pneg %p313
        %p489 = pneg %p337
        %p490 = pneg %p334
        %p491 = scmp.lt.s32.totalorder %s24, 1
        %s492 = scalar_select %p491, %s24, 1
        %s493 = scalar_lea.vmem %s1, %s492
        %p494 = scmp.lt.s32.totalorder %s24, 1
        %s495 = scalar_select %p494, %s24, 1
        %s496 = scalar_lea.vmem %s2, %s495
        %p497 = scmp.lt.s32.totalorder %s24, 1
        %s498 = scalar_select %p497, %s24, 1
        %s499 = smul.addr %s498, 24
        %s500 = smul.addr %s499, 8
        %s501 = scalar_lea.vmem %s3, %s500
        %p502 = scmp.lt.s32.totalorder %s24, 1
        %s503 = scalar_select %p502, %s24, 1
        %s504 = scalar_lea.vmem %s4, %s503
        %p505 = scmp.lt.s32.totalorder %s24, 1
        %s506 = scalar_select %p505, %s24, 1
        %s507 = scalar_lea.vmem %s5, %s506
        %p508 = scmp.lt.s32.totalorder %s24, 1
        %s509 = scalar_select %p508, %s24, 1
        %s510 = smul.addr %s509, 8
        %s511 = smul.addr %s510, 8
        %s512 = scalar_lea.vmem %s6, %s511
        %p513 = scmp.lt.s32.totalorder %s24, 1
        %s514 = scalar_select %p513, %s24, 1
        %s515 = scalar_lea.vmem %s7, %s514
        %p516 = scmp.lt.s32.totalorder %s24, 1
        %s517 = scalar_select %p516, %s24, 1
        %s518 = smul.addr %s517, 8
        %s519 = smul.addr %s518, 8
        %s520 = scalar_lea.vmem %s8, %s519
        %p521 = scmp.lt.s32.totalorder %s24, 1
        %s522 = scalar_select %p521, %s24, 1
        %s523 = scalar_lea.vmem %s9, %s522
        %p524 = scmp.eq.s32.totalorder %s24, 0
        // Predicated region
        $region69: #{gpt_forward.1} parent=67 // pred_check
          %p525 = pneg %p524
        $region70: #{gpt_forward.1} parent=67 // pred_check_branch
          %527 = sbr.rel (%p525) target = $region72
        $region71: #{gpt_forward.1} parent=67 // pred_region
          %v528 = vld [vmem:[%s0] sm:$0xff]
          %v529 = vld [vmem:[%s0 + $0x8] sm:$0xff]
          %vm530 = vcmask 523264
          %531 = vst.msk [vmem:[#allocation2] sm:$0xff] %vm530, %v528
          %532 = vst.msk [vmem:[#allocation2 + $0x8] sm:$0xff] %vm530, %v529
        $region72: #{gpt_forward.1} parent=67 // pred_fallthru
          _
        %v533 = vld [vmem:[#allocation2] sm:$0xff]
        %v534 = vld [vmem:[#allocation2 + $0x8] sm:$0xff]
        %v535 = vld [vmem:[%s493] sm:$0x1]
        %v536 = vld [vmem:[%s496] sm:$0x1]
        %vm537 = vcmask 523264
        %v538 = vsel %vm537, %v533, 0.0
        %539 = vadd.xlane.f32.xlu0 %v538
        %v540 = vpop.xlane.xlu0 %539
        %v541 = vsel %vm537, %v534, 0.0
        %542 = vadd.xlane.f32.xlu0 %v541
        %v543 = vpop.xlane.xlu0 %542
        %v544 = vrcp.pop 64.0
        %v545 = vmul.f32 %v540, %v544
        %v546 = vmul.f32 %v543, %v544
        %v547 = vsub.f32 %v533, %v545
        %v548 = vsub.f32 %v534, %v546
        %v549 = vmul.f32 %v547, %v547
        %v550 = vmul.f32 %v548, %v548
        %v551 = vsel %vm537, %v549, 0.0
        %552 = vadd.xlane.f32.xlu0 %v551
        %v553 = vpop.xlane.xlu0 %552
        %v554 = vsel %vm537, %v550, 0.0
        %555 = vadd.xlane.f32.xlu0 %v554
        %v556 = vpop.xlane.xlu0 %555
        %v557 = vmul.f32 %v553, %v544
        %v558 = vmul.f32 %v556, %v544
        %v559 = vadd.f32 %v557, 1e-05
        %v560 = vadd.f32 %v558, 1e-05
        %v561 = vrsqrt.pop %v559
        %v562 = vrsqrt.pop %v560
        %v563 = vmul.f32 %v547, %v561
        %v564 = vmul.f32 %v548, %v562
        %v566 = vlaneseq
        %v567 = vshrl.u32 %v566, 7
        %v568 = vsub.s32 0, %v567
        %v569 = vrot.slane %v535, %v568
        %v571 = vmul.f32 %v563, %v569
        %v572 = vmul.f32 %v564, %v569
        %v574 = vlaneseq
        %v575 = vshrl.u32 %v574, 7
        %v576 = vsub.s32 0, %v575
        %v577 = vrot.slane %v536, %v576
        %v579 = vadd.f32 %v571, %v577
        %v580 = vadd.f32 %v572, %v577
        %v581 = vld [vmem:[%s501] sm:$0xff]
        %v582 = vld [vmem:[%s501 + $0x8] sm:$0xff]
        %v583 = vld [vmem:[%s501 + $0x10] sm:$0xff]
        %v584 = vld [vmem:[%s501 + $0x18] sm:$0xff]
        %v585 = vld [vmem:[%s501 + $0x20] sm:$0xff]
        %v586 = vld [vmem:[%s501 + $0x28] sm:$0xff]
        %v587 = vld [vmem:[%s501 + $0x30] sm:$0xff]
        %v588 = vld [vmem:[%s501 + $0x38] sm:$0xff]
        %v589 = vld [vmem:[%s501 + $0x40] sm:$0xff]
        %v590 = vld [vmem:[%s501 + $0x48] sm:$0xff]
        %v591 = vld [vmem:[%s501 + $0x50] sm:$0xff]
        %v592 = vld [vmem:[%s501 + $0x58] sm:$0xff]
        %v593 = vld [vmem:[%s501 + $0x60] sm:$0xff]
        %v594 = vld [vmem:[%s501 + $0x68] sm:$0xff]
        %v595 = vld [vmem:[%s501 + $0x70] sm:$0xff]
        %v596 = vld [vmem:[%s501 + $0x78] sm:$0xff]
        %v597 = vld [vmem:[%s501 + $0x80] sm:$0xff]
        %v598 = vld [vmem:[%s501 + $0x88] sm:$0xff]
        %v599 = vld [vmem:[%s501 + $0x90] sm:$0xff]
        %v600 = vld [vmem:[%s501 + $0x98] sm:$0xff]
        %v601 = vld [vmem:[%s501 + $0xa0] sm:$0xff]
        %v602 = vld [vmem:[%s501 + $0xa8] sm:$0xff]
        %v603 = vld [vmem:[%s501 + $0xb0] sm:$0xff]
        %v604 = vld [vmem:[%s501 + $0xb8] sm:$0xff]
        %v606 = vsel %vm537, %v579, 0
        %v609 = vsel %vm537, %v580, 0
        %v612 = vsel %vm537, %v581, 0
        %v615 = vsel %vm537, %v582, 0
        %v618 = vsel %vm537, %v583, 0
        %v621 = vsel %vm537, %v584, 0
        %v624 = vsel %vm537, %v585, 0
        %v627 = vsel %vm537, %v586, 0
        %v630 = vsel %vm537, %v587, 0
        %v633 = vsel %vm537, %v588, 0
        %v636 = vsel %vm537, %v589, 0
        %v639 = vsel %vm537, %v590, 0
        %v642 = vsel %vm537, %v591, 0
        %v645 = vsel %vm537, %v592, 0
        %v648 = vsel %vm537, %v593, 0
        %v651 = vsel %vm537, %v594, 0
        %v654 = vsel %vm537, %v595, 0
        %v657 = vsel %vm537, %v596, 0
        %v660 = vsel %vm537, %v597, 0
        %v663 = vsel %vm537, %v598, 0
        %v666 = vsel %vm537, %v599, 0
        %v669 = vsel %vm537, %v600, 0
        %v672 = vsel %vm537, %v601, 0
        %v675 = vsel %vm537, %v602, 0
        %v678 = vsel %vm537, %v603, 0
        %v681 = vsel %vm537, %v604, 0
        %683 = vmatprep.subr.mxu0 0.0
        %684 = vmatpush1.xpose.msra.mxu0 %v612
        %685 = vmatprep.subr.mxu0 0.0
        %686 = vmatpush1.xpose.msra.mxu0 %v615
        %687 = vmatprep.subr.mxu0 0.0
        %688 = vmatpush1.xpose.msra.mxu0 %v618
        %689 = vmatprep.subr.mxu0 0.0
        %690 = vmatpush1.xpose.msra.mxu0 %v621
        %691 = vmatprep.subr.mxu0 0.0
        %692 = vmatpush1.xpose.msra.mxu0 %v624
        %693 = vmatprep.subr.mxu0 0.0
        %694 = vmatpush1.xpose.msra.mxu0 %v627
        %695 = vmatprep.subr.mxu0 0.0
        %696 = vmatpush1.xpose.msra.mxu0 %v630
        %697 = vmatprep.subr.mxu0 0.0
        %698 = vmatpush1.xpose.msra.mxu0 %v633
        %699 = vmatprep.subr.mxu0 0.0
        %700 = vmatpush1.xpose.msra.mxu0 %v636
        %701 = vmatprep.subr.mxu0 0.0
        %702 = vmatpush1.xpose.msra.mxu0 %v639
        %703 = vmatprep.subr.mxu0 0.0
        %704 = vmatpush1.xpose.msra.mxu0 %v642
        %705 = vmatprep.subr.mxu0 0.0
        %706 = vmatpush1.xpose.msra.mxu0 %v645
        %707 = vmatprep.subr.mxu0 0.0
        %708 = vmatpush1.xpose.msra.mxu0 %v648
        %709 = vmatprep.subr.mxu0 0.0
        %710 = vmatpush1.xpose.msra.mxu0 %v651
        %711 = vmatprep.subr.mxu0 0.0
        %712 = vmatpush1.xpose.msra.mxu0 %v654
        %713 = vmatprep.subr.mxu0 0.0
        %714 = vmatpush1.xpose.msra.mxu0 %v657
        %715 = vmatprep.subr.mxu0 0.0
        %716 = vmatpush1.xpose.msra.mxu0 %v660
        %717 = vmatprep.subr.mxu0 0.0
        %718 = vmatpush1.xpose.msra.mxu0 %v663
        %719 = vmatprep.subr.mxu0 0.0
        %720 = vmatpush1.xpose.msra.mxu0 %v666
        %721 = vmatprep.subr.mxu0 0.0
        %722 = vmatpush1.xpose.msra.mxu0 %v669
        %723 = vmatprep.subr.mxu0 0.0
        %724 = vmatpush1.xpose.msra.mxu0 %v672
        %725 = vmatprep.subr.mxu0 0.0
        %726 = vmatpush1.xpose.msra.mxu0 %v675
        %727 = vmatprep.subr.mxu0 0.0
        %728 = vmatpush1.xpose.msra.mxu0 %v678
        %729 = vmatprep.subr.mxu0 0.0
        %730 = vmatpush1.xpose.msra.mxu0 %v681
        %731 = vmatprep.subr.mxu0 0.0
        %732 = vmatpush1.xpose.msra.mxu0 0.0
        %733 = vmatprep.subr.mxu0 0.0
        %734 = vmatpush1.xpose.msra.mxu0 0.0
        %735 = vmatprep.subr.mxu0 0.0
        %736 = vmatpush1.xpose.msra.mxu0 0.0
        %737 = vmatprep.subr.mxu0 0.0
        %738 = vmatpush1.xpose.msra.mxu0 0.0
        %739 = vmatprep.subr.mxu0 0.0
        %740 = vmatpush1.xpose.msra.mxu0 0.0
        %741 = vmatprep.subr.mxu0 0.0
        %742 = vmatpush1.xpose.msra.mxu0 0.0
        %743 = vmatprep.subr.mxu0 0.0
        %744 = vmatpush1.xpose.msra.mxu0 0.0
        %745 = vmatprep.subr.mxu0 0.0
        %746 = vmatpush1.xpose.msra.mxu0 0.0
        %747 = vmatprep.mubr.f32.mxu0 0.0
        %748 = vmatmul.mubr.f32.gmra.mrb[0].mxu0 %v606
        %v749 = vpop.f32.mrb[0].mxu0
        %v750 = vadd.f32 0.0, %v749
        %v751 = vpop.f32.mrb[0].mxu0
        %v752 = vadd.f32 0.0, %v751
        %753 = vmatprep.mubr.f32.mxu0 0.0
        %754 = vmatmul.mubr.f32.gmra.mrb[0].mxu0 %v609
        %v755 = vpop.f32.mrb[0].mxu0
        %v756 = vadd.f32 0.0, %v755
        %v757 = vpop.f32.mrb[0].mxu0
        %v758 = vadd.f32 0.0, %v757
        %759 = vdwg.mxu0
        %v760 = vlaneseq
        %v761 = vshrl.u32 %v760, 7
        %v762 = vlaneseq
        %v763 = vand.u32 %v762, 127
        %vm764 = vcmp.ge.s32.totalorder %v761, %v763
        %766 = vrot.lane.b32.xlu0 %v750, 64
        %v767 = vpop.permute.xlu0 %766
        %vm768 = vcmask 261120
        %v769 = vsel %vm768, %v750, 0
        %v771 = vsel %vm768, %v767, 0
        %773 = vmatprep.subr.mxu0 0.0
        %774 = vmatpush1.xpose.msra.mxu0 %v771
        %775 = vmatprep.subr.mxu0 0.0
        %776 = vmatpush1.xpose.msra.mxu0 0.0
        %777 = vmatprep.subr.mxu0 0.0
        %778 = vmatpush1.xpose.msra.mxu0 0.0
        %779 = vmatprep.subr.mxu0 0.0
        %780 = vmatpush1.xpose.msra.mxu0 0.0
        %781 = vmatprep.subr.mxu0 0.0
        %782 = vmatpush1.xpose.msra.mxu0 0.0
        %783 = vmatprep.subr.mxu0 0.0
        %784 = vmatpush1.xpose.msra.mxu0 0.0
        %785 = vmatprep.subr.mxu0 0.0
        %786 = vmatpush1.xpose.msra.mxu0 0.0
        %787 = vmatprep.subr.mxu0 0.0
        %788 = vmatpush1.xpose.msra.mxu0 0.0
        %789 = vmatprep.subr.mxu0 0.0
        %790 = vmatpush1.xpose.msra.mxu0 0.0
        %791 = vmatprep.subr.mxu0 0.0
        %792 = vmatpush1.xpose.msra.mxu0 0.0
        %793 = vmatprep.subr.mxu0 0.0
        %794 = vmatpush1.xpose.msra.mxu0 0.0
        %795 = vmatprep.subr.mxu0 0.0
        %796 = vmatpush1.xpose.msra.mxu0 0.0
        %797 = vmatprep.subr.mxu0 0.0
        %798 = vmatpush1.xpose.msra.mxu0 0.0
        %799 = vmatprep.subr.mxu0 0.0
        %800 = vmatpush1.xpose.msra.mxu0 0.0
        %801 = vmatprep.subr.mxu0 0.0
        %802 = vmatpush1.xpose.msra.mxu0 0.0
        %803 = vmatprep.subr.mxu0 0.0
        %804 = vmatpush1.xpose.msra.mxu0 0.0
        %805 = vmatprep.subr.mxu0 0.0
        %806 = vmatpush1.xpose.msra.mxu0 0.0
        %807 = vmatprep.subr.mxu0 0.0
        %808 = vmatpush1.xpose.msra.mxu0 0.0
        %809 = vmatprep.subr.mxu0 0.0
        %810 = vmatpush1.xpose.msra.mxu0 0.0
        %811 = vmatprep.subr.mxu0 0.0
        %812 = vmatpush1.xpose.msra.mxu0 0.0
        %813 = vmatprep.subr.mxu0 0.0
        %814 = vmatpush1.xpose.msra.mxu0 0.0
        %815 = vmatprep.subr.mxu0 0.0
        %816 = vmatpush1.xpose.msra.mxu0 0.0
        %817 = vmatprep.subr.mxu0 0.0
        %818 = vmatpush1.xpose.msra.mxu0 0.0
        %819 = vmatprep.subr.mxu0 0.0
        %820 = vmatpush1.xpose.msra.mxu0 0.0
        %821 = vmatprep.subr.mxu0 0.0
        %822 = vmatpush1.xpose.msra.mxu0 0.0
        %823 = vmatprep.subr.mxu0 0.0
        %824 = vmatpush1.xpose.msra.mxu0 0.0
        %825 = vmatprep.subr.mxu0 0.0
        %826 = vmatpush1.xpose.msra.mxu0 0.0
        %827 = vmatprep.subr.mxu0 0.0
        %828 = vmatpush1.xpose.msra.mxu0 0.0
        %829 = vmatprep.subr.mxu0 0.0
        %830 = vmatpush1.xpose.msra.mxu0 0.0
        %831 = vmatprep.subr.mxu0 0.0
        %832 = vmatpush1.xpose.msra.mxu0 0.0
        %833 = vmatprep.subr.mxu0 0.0
        %834 = vmatpush1.xpose.msra.mxu0 0.0
        %835 = vmatprep.subr.mxu0 0.0
        %836 = vmatpush1.xpose.msra.mxu0 0.0
        %837 = vmatprep.mubr.f32.mxu0 0.0
        %838 = vmatmul.mubr.f32.gmra.mrb[0].mxu0 %v769
        %v839 = vpop.f32.mrb[0].mxu0
        %v840 = vadd.f32 0.0, %v839
        %v841 = vpop.f32.mrb[0].mxu0
        %842 = vdwg.mxu0
        %844 = vrot.lane.b32.xlu0 %v756, 64
        %v845 = vpop.permute.xlu0 %844
        %v846 = vsel %vm768, %v756, 0
        %v848 = vsel %vm768, %v845, 0
        %850 = vmatprep.subr.mxu0 0.0
        %851 = vmatpush1.xpose.msra.mxu0 %v848
        %852 = vmatprep.subr.mxu0 0.0
        %853 = vmatpush1.xpose.msra.mxu0 0.0
        %854 = vmatprep.subr.mxu0 0.0
        %855 = vmatpush1.xpose.msra.mxu0 0.0
        %856 = vmatprep.subr.mxu0 0.0
        %857 = vmatpush1.xpose.msra.mxu0 0.0
        %858 = vmatprep.subr.mxu0 0.0
        %859 = vmatpush1.xpose.msra.mxu0 0.0
        %860 = vmatprep.subr.mxu0 0.0
        %861 = vmatpush1.xpose.msra.mxu0 0.0
        %862 = vmatprep.subr.mxu0 0.0
        %863 = vmatpush1.xpose.msra.mxu0 0.0
        %864 = vmatprep.subr.mxu0 0.0
        %865 = vmatpush1.xpose.msra.mxu0 0.0
        %866 = vmatprep.subr.mxu0 0.0
        %867 = vmatpush1.xpose.msra.mxu0 0.0
        %868 = vmatprep.subr.mxu0 0.0
        %869 = vmatpush1.xpose.msra.mxu0 0.0
        %870 = vmatprep.subr.mxu0 0.0
        %871 = vmatpush1.xpose.msra.mxu0 0.0
        %872 = vmatprep.subr.mxu0 0.0
        %873 = vmatpush1.xpose.msra.mxu0 0.0
        %874 = vmatprep.subr.mxu0 0.0
        %875 = vmatpush1.xpose.msra.mxu0 0.0
        %876 = vmatprep.subr.mxu0 0.0
        %877 = vmatpush1.xpose.msra.mxu0 0.0
        %878 = vmatprep.subr.mxu0 0.0
        %879 = vmatpush1.xpose.msra.mxu0 0.0
        %880 = vmatprep.subr.mxu0 0.0
        %881 = vmatpush1.xpose.msra.mxu0 0.0
        %882 = vmatprep.subr.mxu0 0.0
        %883 = vmatpush1.xpose.msra.mxu0 0.0
        %884 = vmatprep.subr.mxu0 0.0
        %885 = vmatpush1.xpose.msra.mxu0 0.0
        %886 = vmatprep.subr.mxu0 0.0
        %887 = vmatpush1.xpose.msra.mxu0 0.0
        %888 = vmatprep.subr.mxu0 0.0
        %889 = vmatpush1.xpose.msra.mxu0 0.0
        %890 = vmatprep.subr.mxu0 0.0
        %891 = vmatpush1.xpose.msra.mxu0 0.0
        %892 = vmatprep.subr.mxu0 0.0
        %893 = vmatpush1.xpose.msra.mxu0 0.0
        %894 = vmatprep.subr.mxu0 0.0
        %895 = vmatpush1.xpose.msra.mxu0 0.0
        %896 = vmatprep.subr.mxu0 0.0
        %897 = vmatpush1.xpose.msra.mxu0 0.0
        %898 = vmatprep.subr.mxu0 0.0
        %899 = vmatpush1.xpose.msra.mxu0 0.0
        %900 = vmatprep.subr.mxu0 0.0
        %901 = vmatpush1.xpose.msra.mxu0 0.0
        %902 = vmatprep.subr.mxu0 0.0
        %903 = vmatpush1.xpose.msra.mxu0 0.0
        %904 = vmatprep.subr.mxu0 0.0
        %905 = vmatpush1.xpose.msra.mxu0 0.0
        %906 = vmatprep.subr.mxu0 0.0
        %907 = vmatpush1.xpose.msra.mxu0 0.0
        %908 = vmatprep.subr.mxu0 0.0
        %909 = vmatpush1.xpose.msra.mxu0 0.0
        %910 = vmatprep.subr.mxu0 0.0
        %911 = vmatpush1.xpose.msra.mxu0 0.0
        %912 = vmatprep.subr.mxu0 0.0
        %913 = vmatpush1.xpose.msra.mxu0 0.0
        %914 = vmatprep.mubr.f32.mxu0 0.0
        %915 = vmatmul.mubr.f32.gmra.mrb[0].mxu0 %v846
        %v916 = vpop.f32.mrb[0].mxu0
        %v917 = vadd.f32 0.0, %v916
        %v918 = vpop.f32.mrb[0].mxu0
        %919 = vdwg.mxu0
        %v920 = vsel %vm764, 1, 0
        %vm921 = vcmp.eq.s32.totalorder %v920, 1
        %v922 = vsel %vm921, %v840, -1e+30
        %v923 = vsel %vm921, %v917, -1e+30
        %vm924 = vcmask 64512
        %v925 = vsel %vm924, %v922, -inf
        %926 = vmax.xlane.f32.xlu0 %v925
        %v927 = vpop.xlane.xlu0 %926
        %v928 = vsel %vm924, %v923, -inf
        %929 = vmax.xlane.f32.xlu0 %v928
        %v930 = vpop.xlane.xlu0 %929
        %v931 = vsub.f32 %v922, %v927
        %v932 = vsub.f32 %v923, %v930
        %v933 = vmul.f32 %v931, 1.442695
        %v934 = vpow.pop %v933
        %v935 = vmul.f32 %v932, 1.442695
        %v936 = vpow.pop %v935
        %v937 = vsel %vm924, %v934, 0.0
        %938 = vadd.xlane.f32.xlu0 %v937
        %v939 = vpop.xlane.xlu0 %938
        %v940 = vsel %vm924, %v936, 0.0
        %941 = vadd.xlane.f32.xlu0 %v940
        %v942 = vpop.xlane.xlu0 %941
        %v943 = vrcp.pop %v939
        %v944 = vmul.f32 %v934, %v943
        %v945 = vrcp.pop %v942
        %v946 = vmul.f32 %v936, %v945
        %v948 = vsel %vm924, %v944, 0
        %950 = vmatprep.subr.mxu0 0.0
        %951 = vmatpush1.msra.mxu0 %v752
        %952 = vmatprep.subr.mxu0 0.0
        %953 = vmatpush1.msra.mxu0 0.0
        %954 = vmatprep.subr.mxu0 0.0
        %955 = vmatpush1.msra.mxu0 0.0
        %956 = vmatprep.subr.mxu0 0.0
        %957 = vmatpush1.msra.mxu0 0.0
        %958 = vmatprep.subr.mxu0 0.0
        %959 = vmatpush1.msra.mxu0 0.0
        %960 = vmatprep.subr.mxu0 0.0
        %961 = vmatpush1.msra.mxu0 0.0
        %962 = vmatprep.subr.mxu0 0.0
        %963 = vmatpush1.msra.mxu0 0.0
        %964 = vmatprep.subr.mxu0 0.0
        %965 = vmatpush1.msra.mxu0 0.0
        %966 = vmatprep.subr.mxu0 0.0
        %967 = vmatpush1.msra.mxu0 0.0
        %968 = vmatprep.subr.mxu0 0.0
        %969 = vmatpush1.msra.mxu0 0.0
        %970 = vmatprep.subr.mxu0 0.0
        %971 = vmatpush1.msra.mxu0 0.0
        %972 = vmatprep.subr.mxu0 0.0
        %973 = vmatpush1.msra.mxu0 0.0
        %974 = vmatprep.subr.mxu0 0.0
        %975 = vmatpush1.msra.mxu0 0.0
        %976 = vmatprep.subr.mxu0 0.0
        %977 = vmatpush1.msra.mxu0 0.0
        %978 = vmatprep.subr.mxu0 0.0
        %979 = vmatpush1.msra.mxu0 0.0
        %980 = vmatprep.subr.mxu0 0.0
        %981 = vmatpush1.msra.mxu0 0.0
        %982 = vmatprep.subr.mxu0 0.0
        %983 = vmatpush1.msra.mxu0 0.0
        %984 = vmatprep.subr.mxu0 0.0
        %985 = vmatpush1.msra.mxu0 0.0
        %986 = vmatprep.subr.mxu0 0.0
        %987 = vmatpush1.msra.mxu0 0.0
        %988 = vmatprep.subr.mxu0 0.0
        %989 = vmatpush1.msra.mxu0 0.0
        %990 = vmatprep.subr.mxu0 0.0
        %991 = vmatpush1.msra.mxu0 0.0
        %992 = vmatprep.subr.mxu0 0.0
        %993 = vmatpush1.msra.mxu0 0.0
        %994 = vmatprep.subr.mxu0 0.0
        %995 = vmatpush1.msra.mxu0 0.0
        %996 = vmatprep.subr.mxu0 0.0
        %997 = vmatpush1.msra.mxu0 0.0
        %998 = vmatprep.subr.mxu0 0.0
        %999 = vmatpush1.msra.mxu0 0.0
        %1000 = vmatprep.subr.mxu0 0.0
        %1001 = vmatpush1.msra.mxu0 0.0
        %1002 = vmatprep.subr.mxu0 0.0
        %1003 = vmatpush1.msra.mxu0 0.0
        %1004 = vmatprep.subr.mxu0 0.0
        %1005 = vmatpush1.msra.mxu0 0.0
        %1006 = vmatprep.subr.mxu0 0.0
        %1007 = vmatpush1.msra.mxu0 0.0
        %1008 = vmatprep.subr.mxu0 0.0
        %1009 = vmatpush1.msra.mxu0 0.0
        %1010 = vmatprep.subr.mxu0 0.0
        %1011 = vmatpush1.msra.mxu0 0.0
        %1012 = vmatprep.subr.mxu0 0.0
        %1013 = vmatpush1.msra.mxu0 0.0
        %1014 = vmatprep.mubr.f32.mxu0 0.0
        %1015 = vmatmul.mubr.f32.gmra.mrb[0].mxu0 %v948
        %v1016 = vpop.f32.mrb[0].mxu0
        %v1017 = vadd.f32 0.0, %v1016
        %v1018 = vpop.f32.mrb[0].mxu0
        %1019 = vdwg.mxu0
        %v1021 = vsel %vm924, %v946, 0
        %1023 = vmatprep.subr.mxu0 0.0
        %1024 = vmatpush1.msra.mxu0 %v758
        %1025 = vmatprep.subr.mxu0 0.0
        %1026 = vmatpush1.msra.mxu0 0.0
        %1027 = vmatprep.subr.mxu0 0.0
        %1028 = vmatpush1.msra.mxu0 0.0
        %1029 = vmatprep.subr.mxu0 0.0
        %1030 = vmatpush1.msra.mxu0 0.0
        %1031 = vmatprep.subr.mxu0 0.0
        %1032 = vmatpush1.msra.mxu0 0.0
        %1033 = vmatprep.subr.mxu0 0.0
        %1034 = vmatpush1.msra.mxu0 0.0
        %1035 = vmatprep.subr.mxu0 0.0
        %1036 = vmatpush1.msra.mxu0 0.0
        %1037 = vmatprep.subr.mxu0 0.0
        %1038 = vmatpush1.msra.mxu0 0.0
        %1039 = vmatprep.subr.mxu0 0.0
        %1040 = vmatpush1.msra.mxu0 0.0
        %1041 = vmatprep.subr.mxu0 0.0
        %1042 = vmatpush1.msra.mxu0 0.0
        %1043 = vmatprep.subr.mxu0 0.0
        %1044 = vmatpush1.msra.mxu0 0.0
        %1045 = vmatprep.subr.mxu0 0.0
        %1046 = vmatpush1.msra.mxu0 0.0
        %1047 = vmatprep.subr.mxu0 0.0
        %1048 = vmatpush1.msra.mxu0 0.0
        %1049 = vmatprep.subr.mxu0 0.0
        %1050 = vmatpush1.msra.mxu0 0.0
        %1051 = vmatprep.subr.mxu0 0.0
        %1052 = vmatpush1.msra.mxu0 0.0
        %1053 = vmatprep.subr.mxu0 0.0
        %1054 = vmatpush1.msra.mxu0 0.0
        %1055 = vmatprep.subr.mxu0 0.0
        %1056 = vmatpush1.msra.mxu0 0.0
        %1057 = vmatprep.subr.mxu0 0.0
        %1058 = vmatpush1.msra.mxu0 0.0
        %1059 = vmatprep.subr.mxu0 0.0
        %1060 = vmatpush1.msra.mxu0 0.0
        %1061 = vmatprep.subr.mxu0 0.0
        %1062 = vmatpush1.msra.mxu0 0.0
        %1063 = vmatprep.subr.mxu0 0.0
        %1064 = vmatpush1.msra.mxu0 0.0
        %1065 = vmatprep.subr.mxu0 0.0
        %1066 = vmatpush1.msra.mxu0 0.0
        %1067 = vmatprep.subr.mxu0 0.0
        %1068 = vmatpush1.msra.mxu0 0.0
        %1069 = vmatprep.subr.mxu0 0.0
        %1070 = vmatpush1.msra.mxu0 0.0
        %1071 = vmatprep.subr.mxu0 0.0
        %1072 = vmatpush1.msra.mxu0 0.0
        %1073 = vmatprep.subr.mxu0 0.0
        %1074 = vmatpush1.msra.mxu0 0.0
        %1075 = vmatprep.subr.mxu0 0.0
        %1076 = vmatpush1.msra.mxu0 0.0
        %1077 = vmatprep.subr.mxu0 0.0
        %1078 = vmatpush1.msra.mxu0 0.0
        %1079 = vmatprep.subr.mxu0 0.0
        %1080 = vmatpush1.msra.mxu0 0.0
        %1081 = vmatprep.subr.mxu0 0.0
        %1082 = vmatpush1.msra.mxu0 0.0
        %1083 = vmatprep.subr.mxu0 0.0
        %1084 = vmatpush1.msra.mxu0 0.0
        %1085 = vmatprep.subr.mxu0 0.0
        %1086 = vmatpush1.msra.mxu0 0.0
        %1087 = vmatprep.mubr.f32.mxu0 0.0
        %1088 = vmatmul.mubr.f32.gmra.mrb[0].mxu0 %v1021
        %v1089 = vpop.f32.mrb[0].mxu0
        %v1090 = vadd.f32 0.0, %v1089
        %v1091 = vpop.f32.mrb[0].mxu0
        %1092 = vdwg.mxu0
        %1093 = vst.msk [vmem:[#allocation3] sm:$0xff] %vm768, %v1017
        %1094 = vst.msk [vmem:[#allocation3 + $0x8] sm:$0xff] %vm768, %v1090
        %1095 = vrot.lane.b32.xlu0 %v750, 96
        %v1096 = vpop.permute.xlu0 %1095
        %1097 = vrot.lane.b32.xlu0 %v750, 32
        %v1098 = vpop.permute.xlu0 %1097
        %v1099 = vsel %vm768, %v1096, 0
        %v1101 = vsel %vm768, %v1098, 0
        %1103 = vmatprep.subr.mxu0 0.0
        %1104 = vmatpush1.xpose.msra.mxu0 %v1101
        %1105 = vmatprep.subr.mxu0 0.0
        %1106 = vmatpush1.xpose.msra.mxu0 0.0
        %1107 = vmatprep.subr.mxu0 0.0
        %1108 = vmatpush1.xpose.msra.mxu0 0.0
        %1109 = vmatprep.subr.mxu0 0.0
        %1110 = vmatpush1.xpose.msra.mxu0 0.0
        %1111 = vmatprep.subr.mxu0 0.0
        %1112 = vmatpush1.xpose.msra.mxu0 0.0
        %1113 = vmatprep.subr.mxu0 0.0
        %1114 = vmatpush1.xpose.msra.mxu0 0.0
        %1115 = vmatprep.subr.mxu0 0.0
        %1116 = vmatpush1.xpose.msra.mxu0 0.0
        %1117 = vmatprep.subr.mxu0 0.0
        %1118 = vmatpush1.xpose.msra.mxu0 0.0
        %1119 = vmatprep.subr.mxu0 0.0
        %1120 = vmatpush1.xpose.msra.mxu0 0.0
        %1121 = vmatprep.subr.mxu0 0.0
        %1122 = vmatpush1.xpose.msra.mxu0 0.0
        %1123 = vmatprep.subr.mxu0 0.0
        %1124 = vmatpush1.xpose.msra.mxu0 0.0
        %1125 = vmatprep.subr.mxu0 0.0
        %1126 = vmatpush1.xpose.msra.mxu0 0.0
        %1127 = vmatprep.subr.mxu0 0.0
        %1128 = vmatpush1.xpose.msra.mxu0 0.0
        %1129 = vmatprep.subr.mxu0 0.0
        %1130 = vmatpush1.xpose.msra.mxu0 0.0
        %1131 = vmatprep.subr.mxu0 0.0
        %1132 = vmatpush1.xpose.msra.mxu0 0.0
        %1133 = vmatprep.subr.mxu0 0.0
        %1134 = vmatpush1.xpose.msra.mxu0 0.0
        %1135 = vmatprep.subr.mxu0 0.0
        %1136 = vmatpush1.xpose.msra.mxu0 0.0
        %1137 = vmatprep.subr.mxu0 0.0
        %1138 = vmatpush1.xpose.msra.mxu0 0.0
        %1139 = vmatprep.subr.mxu0 0.0
        %1140 = vmatpush1.xpose.msra.mxu0 0.0
        %1141 = vmatprep.subr.mxu0 0.0
        %1142 = vmatpush1.xpose.msra.mxu0 0.0
        %1143 = vmatprep.subr.mxu0 0.0
        %1144 = vmatpush1.xpose.msra.mxu0 0.0
        %1145 = vmatprep.subr.mxu0 0.0
        %1146 = vmatpush1.xpose.msra.mxu0 0.0
        %1147 = vmatprep.subr.mxu0 0.0
        %1148 = vmatpush1.xpose.msra.mxu0 0.0
        %1149 = vmatprep.subr.mxu0 0.0
        %1150 = vmatpush1.xpose.msra.mxu0 0.0
        %1151 = vmatprep.subr.mxu0 0.0
        %1152 = vmatpush1.xpose.msra.mxu0 0.0
        %1153 = vmatprep.subr.mxu0 0.0
        %1154 = vmatpush1.xpose.msra.mxu0 0.0
        %1155 = vmatprep.subr.mxu0 0.0
        %1156 = vmatpush1.xpose.msra.mxu0 0.0
        %1157 = vmatprep.subr.mxu0 0.0
        %1158 = vmatpush1.xpose.msra.mxu0 0.0
        %1159 = vmatprep.subr.mxu0 0.0
        %1160 = vmatpush1.xpose.msra.mxu0 0.0
        %1161 = vmatprep.subr.mxu0 0.0
        %1162 = vmatpush1.xpose.msra.mxu0 0.0
        %1163 = vmatprep.subr.mxu0 0.0
        %1164 = vmatpush1.xpose.msra.mxu0 0.0
        %1165 = vmatprep.subr.mxu0 0.0
        %1166 = vmatpush1.xpose.msra.mxu0 0.0
        %1167 = vmatprep.mubr.f32.mxu0 0.0
        %1168 = vmatmul.mubr.f32.gmra.mrb[0].mxu0 %v1099
        %v1169 = vpop.f32.mrb[0].mxu0
        %v1170 = vadd.f32 0.0, %v1169
        %v1171 = vpop.f32.mrb[0].mxu0
        %1172 = vdwg.mxu0
        %1173 = vrot.lane.b32.xlu0 %v756, 96
        %v1174 = vpop.permute.xlu0 %1173
        %1175 = vrot.lane.b32.xlu0 %v756, 32
        %v1176 = vpop.permute.xlu0 %1175
        %v1177 = vsel %vm768, %v1174, 0
        %v1179 = vsel %vm768, %v1176, 0
        %1181 = vmatprep.subr.mxu0 0.0
        %1182 = vmatpush1.xpose.msra.mxu0 %v1179
        %1183 = vmatprep.subr.mxu0 0.0
        %1184 = vmatpush1.xpose.msra.mxu0 0.0
        %1185 = vmatprep.subr.mxu0 0.0
        %1186 = vmatpush1.xpose.msra.mxu0 0.0
        %1187 = vmatprep.subr.mxu0 0.0
        %1188 = vmatpush1.xpose.msra.mxu0 0.0
        %1189 = vmatprep.subr.mxu0 0.0
        %1190 = vmatpush1.xpose.msra.mxu0 0.0
        %1191 = vmatprep.subr.mxu0 0.0
        %1192 = vmatpush1.xpose.msra.mxu0 0.0
        %1193 = vmatprep.subr.mxu0 0.0
        %1194 = vmatpush1.xpose.msra.mxu0 0.0
        %1195 = vmatprep.subr.mxu0 0.0
        %1196 = vmatpush1.xpose.msra.mxu0 0.0
        %1197 = vmatprep.subr.mxu0 0.0
        %1198 = vmatpush1.xpose.msra.mxu0 0.0
        %1199 = vmatprep.subr.mxu0 0.0
        %1200 = vmatpush1.xpose.msra.mxu0 0.0
        %1201 = vmatprep.subr.mxu0 0.0
        %1202 = vmatpush1.xpose.msra.mxu0 0.0
        %1203 = vmatprep.subr.mxu0 0.0
        %1204 = vmatpush1.xpose.msra.mxu0 0.0
        %1205 = vmatprep.subr.mxu0 0.0
        %1206 = vmatpush1.xpose.msra.mxu0 0.0
        %1207 = vmatprep.subr.mxu0 0.0
        %1208 = vmatpush1.xpose.msra.mxu0 0.0
        %1209 = vmatprep.subr.mxu0 0.0
        %1210 = vmatpush1.xpose.msra.mxu0 0.0
        %1211 = vmatprep.subr.mxu0 0.0
        %1212 = vmatpush1.xpose.msra.mxu0 0.0
        %1213 = vmatprep.subr.mxu0 0.0
        %1214 = vmatpush1.xpose.msra.mxu0 0.0
        %1215 = vmatprep.subr.mxu0 0.0
        %1216 = vmatpush1.xpose.msra.mxu0 0.0
        %1217 = vmatprep.subr.mxu0 0.0
        %1218 = vmatpush1.xpose.msra.mxu0 0.0
        %1219 = vmatprep.subr.mxu0 0.0
        %1220 = vmatpush1.xpose.msra.mxu0 0.0
        %1221 = vmatprep.subr.mxu0 0.0
        %1222 = vmatpush1.xpose.msra.mxu0 0.0
        %1223 = vmatprep.subr.mxu0 0.0
        %1224 = vmatpush1.xpose.msra.mxu0 0.0
        %1225 = vmatprep.subr.mxu0 0.0
        %1226 = vmatpush1.xpose.msra.mxu0 0.0
        %1227 = vmatprep.subr.mxu0 0.0
        %1228 = vmatpush1.xpose.msra.mxu0 0.0
        %1229 = vmatprep.subr.mxu0 0.0
        %1230 = vmatpush1.xpose.msra.mxu0 0.0
        %1231 = vmatprep.subr.mxu0 0.0
        %1232 = vmatpush1.xpose.msra.mxu0 0.0
        %1233 = vmatprep.subr.mxu0 0.0
        %1234 = vmatpush1.xpose.msra.mxu0 0.0
        %1235 = vmatprep.subr.mxu0 0.0
        %1236 = vmatpush1.xpose.msra.mxu0 0.0
        %1237 = vmatprep.subr.mxu0 0.0
        %1238 = vmatpush1.xpose.msra.mxu0 0.0
        %1239 = vmatprep.subr.mxu0 0.0
        %1240 = vmatpush1.xpose.msra.mxu0 0.0
        %1241 = vmatprep.subr.mxu0 0.0
        %1242 = vmatpush1.xpose.msra.mxu0 0.0
        %1243 = vmatprep.subr.mxu0 0.0
        %1244 = vmatpush1.xpose.msra.mxu0 0.0
        %1245 = vmatprep.mubr.f32.mxu0 0.0
        %1246 = vmatmul.mubr.f32.gmra.mrb[0].mxu0 %v1177
        %v1247 = vpop.f32.mrb[0].mxu0
        %v1248 = vadd.f32 0.0, %v1247
        %v1249 = vpop.f32.mrb[0].mxu0
        %1250 = vdwg.mxu0
        %v1251 = vsel %vm921, %v1170, -1e+30
        %v1252 = vsel %vm921, %v1248, -1e+30
        %v1253 = vsel %vm924, %v1251, -inf
        %1254 = vmax.xlane.f32.xlu0 %v1253
        %v1255 = vpop.xlane.xlu0 %1254
        %v1256 = vsel %vm924, %v1252, -inf
        %1257 = vmax.xlane.f32.xlu0 %v1256
        %v1258 = vpop.xlane.xlu0 %1257
        %v1259 = vsub.f32 %v1251, %v1255
        %v1260 = vsub.f32 %v1252, %v1258
        %v1261 = vmul.f32 %v1259, 1.442695
        %v1262 = vpow.pop %v1261
        %v1263 = vmul.f32 %v1260, 1.442695
        %v1264 = vpow.pop %v1263
        %v1265 = vsel %vm924, %v1262, 0.0
        %1266 = vadd.xlane.f32.xlu0 %v1265
        %v1267 = vpop.xlane.xlu0 %1266
        %v1268 = vsel %vm924, %v1264, 0.0
        %1269 = vadd.xlane.f32.xlu0 %v1268
        %v1270 = vpop.xlane.xlu0 %1269
        %v1271 = vrcp.pop %v1267
        %v1272 = vmul.f32 %v1262, %v1271
        %v1273 = vrcp.pop %v1270
        %v1274 = vmul.f32 %v1264, %v1273
        %1276 = vrot.lane.b32.xlu0 %v752, 96
        %v1277 = vpop.permute.xlu0 %1276
        %v1280 = vsel %vm924, %v1272, 0
        %1282 = vmatprep.subr.mxu0 0.0
        %1283 = vmatpush1.msra.mxu0 %v1277
        %1284 = vmatprep.subr.mxu0 0.0
        %1285 = vmatpush1.msra.mxu0 0.0
        %1286 = vmatprep.subr.mxu0 0.0
        %1287 = vmatpush1.msra.mxu0 0.0
        %1288 = vmatprep.subr.mxu0 0.0
        %1289 = vmatpush1.msra.mxu0 0.0
        %1290 = vmatprep.subr.mxu0 0.0
        %1291 = vmatpush1.msra.mxu0 0.0
        %1292 = vmatprep.subr.mxu0 0.0
        %1293 = vmatpush1.msra.mxu0 0.0
        %1294 = vmatprep.subr.mxu0 0.0
        %1295 = vmatpush1.msra.mxu0 0.0
        %1296 = vmatprep.subr.mxu0 0.0
        %1297 = vmatpush1.msra.mxu0 0.0
        %1298 = vmatprep.subr.mxu0 0.0
        %1299 = vmatpush1.msra.mxu0 0.0
        %1300 = vmatprep.subr.mxu0 0.0
        %1301 = vmatpush1.msra.mxu0 0.0
        %1302 = vmatprep.subr.mxu0 0.0
        %1303 = vmatpush1.msra.mxu0 0.0
        %1304 = vmatprep.subr.mxu0 0.0
        %1305 = vmatpush1.msra.mxu0 0.0
        %1306 = vmatprep.subr.mxu0 0.0
        %1307 = vmatpush1.msra.mxu0 0.0
        %1308 = vmatprep.subr.mxu0 0.0
        %1309 = vmatpush1.msra.mxu0 0.0
        %1310 = vmatprep.subr.mxu0 0.0
        %1311 = vmatpush1.msra.mxu0 0.0
        %1312 = vmatprep.subr.mxu0 0.0
        %1313 = vmatpush1.msra.mxu0 0.0
        %1314 = vmatprep.subr.mxu0 0.0
        %1315 = vmatpush1.msra.mxu0 0.0
        %1316 = vmatprep.subr.mxu0 0.0
        %1317 = vmatpush1.msra.mxu0 0.0
        %1318 = vmatprep.subr.mxu0 0.0
        %1319 = vmatpush1.msra.mxu0 0.0
        %1320 = vmatprep.subr.mxu0 0.0
        %1321 = vmatpush1.msra.mxu0 0.0
        %1322 = vmatprep.subr.mxu0 0.0
        %1323 = vmatpush1.msra.mxu0 0.0
        %1324 = vmatprep.subr.mxu0 0.0
        %1325 = vmatpush1.msra.mxu0 0.0
        %1326 = vmatprep.subr.mxu0 0.0
        %1327 = vmatpush1.msra.mxu0 0.0
        %1328 = vmatprep.subr.mxu0 0.0
        %1329 = vmatpush1.msra.mxu0 0.0
        %1330 = vmatprep.subr.mxu0 0.0
        %1331 = vmatpush1.msra.mxu0 0.0
        %1332 = vmatprep.subr.mxu0 0.0
        %1333 = vmatpush1.msra.mxu0 0.0
        %1334 = vmatprep.subr.mxu0 0.0
        %1335 = vmatpush1.msra.mxu0 0.0
        %1336 = vmatprep.subr.mxu0 0.0
        %1337 = vmatpush1.msra.mxu0 0.0
        %1338 = vmatprep.subr.mxu0 0.0
        %1339 = vmatpush1.msra.mxu0 0.0
        %1340 = vmatprep.subr.mxu0 0.0
        %1341 = vmatpush1.msra.mxu0 0.0
        %1342 = vmatprep.subr.mxu0 0.0
        %1343 = vmatpush1.msra.mxu0 0.0
        %1344 = vmatprep.subr.mxu0 0.0
        %1345 = vmatpush1.msra.mxu0 0.0
        %1346 = vmatprep.mubr.f32.mxu0 0.0
        %1347 = vmatmul.mubr.f32.gmra.mrb[0].mxu0 %v1280
        %v1348 = vpop.f32.mrb[0].mxu0
        %v1349 = vadd.f32 0.0, %v1348
        %v1350 = vpop.f32.mrb[0].mxu0
        %1351 = vdwg.mxu0
        %1353 = vrot.lane.b32.xlu0 %v758, 96
        %v1354 = vpop.permute.xlu0 %1353
        %v1357 = vsel %vm924, %v1274, 0
        %1359 = vmatprep.subr.mxu0 0.0
        %1360 = vmatpush1.msra.mxu0 %v1354
        %1361 = vmatprep.subr.mxu0 0.0
        %1362 = vmatpush1.msra.mxu0 0.0
        %1363 = vmatprep.subr.mxu0 0.0
        %1364 = vmatpush1.msra.mxu0 0.0
        %1365 = vmatprep.subr.mxu0 0.0
        %1366 = vmatpush1.msra.mxu0 0.0
        %1367 = vmatprep.subr.mxu0 0.0
        %1368 = vmatpush1.msra.mxu0 0.0
        %1369 = vmatprep.subr.mxu0 0.0
        %1370 = vmatpush1.msra.mxu0 0.0
        %1371 = vmatprep.subr.mxu0 0.0
        %1372 = vmatpush1.msra.mxu0 0.0
        %1373 = vmatprep.subr.mxu0 0.0
        %1374 = vmatpush1.msra.mxu0 0.0
        %1375 = vmatprep.subr.mxu0 0.0
        %1376 = vmatpush1.msra.mxu0 0.0
        %1377 = vmatprep.subr.mxu0 0.0
        %1378 = vmatpush1.msra.mxu0 0.0
        %1379 = vmatprep.subr.mxu0 0.0
        %1380 = vmatpush1.msra.mxu0 0.0
        %1381 = vmatprep.subr.mxu0 0.0
        %1382 = vmatpush1.msra.mxu0 0.0
        %1383 = vmatprep.subr.mxu0 0.0
        %1384 = vmatpush1.msra.mxu0 0.0
        %1385 = vmatprep.subr.mxu0 0.0
        %1386 = vmatpush1.msra.mxu0 0.0
        %1387 = vmatprep.subr.mxu0 0.0
        %1388 = vmatpush1.msra.mxu0 0.0
        %1389 = vmatprep.subr.mxu0 0.0
        %1390 = vmatpush1.msra.mxu0 0.0
        %1391 = vmatprep.subr.mxu0 0.0
        %1392 = vmatpush1.msra.mxu0 0.0
        %1393 = vmatprep.subr.mxu0 0.0
        %1394 = vmatpush1.msra.mxu0 0.0
        %1395 = vmatprep.subr.mxu0 0.0
        %1396 = vmatpush1.msra.mxu0 0.0
        %1397 = vmatprep.subr.mxu0 0.0
        %1398 = vmatpush1.msra.mxu0 0.0
        %1399 = vmatprep.subr.mxu0 0.0
        %1400 = vmatpush1.msra.mxu0 0.0
        %1401 = vmatprep.subr.mxu0 0.0
        %1402 = vmatpush1.msra.mxu0 0.0
        %1403 = vmatprep.subr.mxu0 0.0
        %1404 = vmatpush1.msra.mxu0 0.0
        %1405 = vmatprep.subr.mxu0 0.0
        %1406 = vmatpush1.msra.mxu0 0.0
        %1407 = vmatprep.subr.mxu0 0.0
        %1408 = vmatpush1.msra.mxu0 0.0
        %1409 = vmatprep.subr.mxu0 0.0
        %1410 = vmatpush1.msra.mxu0 0.0
        %1411 = vmatprep.subr.mxu0 0.0
        %1412 = vmatpush1.msra.mxu0 0.0
        %1413 = vmatprep.subr.mxu0 0.0
        %1414 = vmatpush1.msra.mxu0 0.0
        %1415 = vmatprep.subr.mxu0 0.0
        %1416 = vmatpush1.msra.mxu0 0.0
        %1417 = vmatprep.subr.mxu0 0.0
        %1418 = vmatpush1.msra.mxu0 0.0
        %1419 = vmatprep.subr.mxu0 0.0
        %1420 = vmatpush1.msra.mxu0 0.0
        %1421 = vmatprep.subr.mxu0 0.0
        %1422 = vmatpush1.msra.mxu0 0.0
        %1423 = vmatprep.mubr.f32.mxu0 0.0
        %1424 = vmatmul.mubr.f32.gmra.mrb[0].mxu0 %v1357
        %v1425 = vpop.f32.mrb[0].mxu0
        %v1426 = vadd.f32 0.0, %v1425
        %v1427 = vpop.f32.mrb[0].mxu0
        %1428 = vdwg.mxu0
        %1431 = vrot.lane.b32.xlu0 %v1349, 32
        %v1432 = vpop.permute.xlu0 %1431
        %1433 = vrot.lane.b32.xlu0 %v1426, 32
        %v1434 = vpop.permute.xlu0 %1433
        %vm1437 = vcmask 523520
        %1438 = vst.msk [vmem:[#allocation3] sm:$0xff] %vm1437, %v1432
        %1439 = vst.msk [vmem:[#allocation3 + $0x8] sm:$0xff] %vm1437, %v1434
        %v1440 = vld [vmem:[#allocation3] sm:$0xff]
        %v1441 = vld [vmem:[#allocation3 + $0x8] sm:$0xff]
        %v1442 = vadd.f32 %v1440, %v533
        %v1443 = vadd.f32 %v1441, %v534
        %v1444 = vld [vmem:[%s504] sm:$0x1]
        %v1445 = vld [vmem:[%s507] sm:$0x1]
        %v1446 = vsel %vm537, %v1442, 0.0
        %1447 = vadd.xlane.f32.xlu0 %v1446
        %v1448 = vpop.xlane.xlu0 %1447
        %v1449 = vsel %vm537, %v1443, 0.0
        %1450 = vadd.xlane.f32.xlu0 %v1449
        %v1451 = vpop.xlane.xlu0 %1450
        %v1452 = vmul.f32 %v1448, %v544
        %v1453 = vmul.f32 %v1451, %v544
        %v1454 = vsub.f32 %v1442, %v1452
        %v1455 = vsub.f32 %v1443, %v1453
        %v1456 = vmul.f32 %v1454, %v1454
        %v1457 = vmul.f32 %v1455, %v1455
        %v1458 = vsel %vm537, %v1456, 0.0
        %1459 = vadd.xlane.f32.xlu0 %v1458
        %v1460 = vpop.xlane.xlu0 %1459
        %v1461 = vsel %vm537, %v1457, 0.0
        %1462 = vadd.xlane.f32.xlu0 %v1461
        %v1463 = vpop.xlane.xlu0 %1462
        %v1464 = vmul.f32 %v1460, %v544
        %v1465 = vmul.f32 %v1463, %v544
        %v1466 = vadd.f32 %v1464, 1e-05
        %v1467 = vadd.f32 %v1465, 1e-05
        %v1468 = vrsqrt.pop %v1466
        %v1469 = vrsqrt.pop %v1467
        %v1470 = vmul.f32 %v1454, %v1468
        %v1471 = vmul.f32 %v1455, %v1469
        %v1473 = vlaneseq
        %v1474 = vshrl.u32 %v1473, 7
        %v1475 = vsub.s32 0, %v1474
        %v1476 = vrot.slane %v1444, %v1475
        %v1478 = vmul.f32 %v1470, %v1476
        %v1479 = vmul.f32 %v1471, %v1476
        %v1481 = vlaneseq
        %v1482 = vshrl.u32 %v1481, 7
        %v1483 = vsub.s32 0, %v1482
        %v1484 = vrot.slane %v1445, %v1483
        %v1486 = vadd.f32 %v1478, %v1484
        %v1487 = vadd.f32 %v1479, %v1484
        %v1488 = vld [vmem:[%s512] sm:$0xff]
        %v1489 = vld [vmem:[%s512 + $0x8] sm:$0xff]
        %v1490 = vld [vmem:[%s512 + $0x10] sm:$0xff]
        %v1491 = vld [vmem:[%s512 + $0x18] sm:$0xff]
        %v1492 = vld [vmem:[%s512 + $0x20] sm:$0xff]
        %v1493 = vld [vmem:[%s512 + $0x28] sm:$0xff]
        %v1494 = vld [vmem:[%s512 + $0x30] sm:$0xff]
        %v1495 = vld [vmem:[%s512 + $0x38] sm:$0xff]
        %v1496 = vld [vmem:[%s515] sm:$0x1]
        %v1498 = vlaneseq
        %v1499 = vshrl.u32 %v1498, 7
        %v1500 = vsub.s32 0, %v1499
        %v1501 = vrot.slane %v1496, %v1500
        %v1504 = vsel %vm537, %v1486, 0
        %v1507 = vsel %vm537, %v1487, 0
        %v1510 = vsel %vm537, %v1488, 0
        %v1513 = vsel %vm537, %v1489, 0
        %v1516 = vsel %vm537, %v1490, 0
        %v1519 = vsel %vm537, %v1491, 0
        %v1522 = vsel %vm537, %v1492, 0
        %v1525 = vsel %vm537, %v1493, 0
        %v1528 = vsel %vm537, %v1494, 0
        %v1531 = vsel %vm537, %v1495, 0
        %1533 = vmatprep.subr.mxu0 0.0
        %1534 = vmatpush1.xpose.msra.mxu0 %v1510
        %1535 = vmatprep.subr.mxu0 0.0
        %1536 = vmatpush1.xpose.msra.mxu0 %v1513
        %1537 = vmatprep.subr.mxu0 0.0
        %1538 = vmatpush1.xpose.msra.mxu0 %v1516
        %1539 = vmatprep.subr.mxu0 0.0
        %1540 = vmatpush1.xpose.msra.mxu0 %v1519
        %1541 = vmatprep.subr.mxu0 0.0
        %1542 = vmatpush1.xpose.msra.mxu0 %v1522
        %1543 = vmatprep.subr.mxu0 0.0
        %1544 = vmatpush1.xpose.msra.mxu0 %v1525
        %1545 = vmatprep.subr.mxu0 0.0
        %1546 = vmatpush1.xpose.msra.mxu0 %v1528
        %1547 = vmatprep.subr.mxu0 0.0
        %1548 = vmatpush1.xpose.msra.mxu0 %v1531
        %1549 = vmatprep.subr.mxu0 0.0
        %1550 = vmatpush1.xpose.msra.mxu0 0.0
        %1551 = vmatprep.subr.mxu0 0.0
        %1552 = vmatpush1.xpose.msra.mxu0 0.0
        %1553 = vmatprep.subr.mxu0 0.0
        %1554 = vmatpush1.xpose.msra.mxu0 0.0
        %1555 = vmatprep.subr.mxu0 0.0
        %1556 = vmatpush1.xpose.msra.mxu0 0.0
        %1557 = vmatprep.subr.mxu0 0.0
        %1558 = vmatpush1.xpose.msra.mxu0 0.0
        %1559 = vmatprep.subr.mxu0 0.0
        %1560 = vmatpush1.xpose.msra.mxu0 0.0
        %1561 = vmatprep.subr.mxu0 0.0
        %1562 = vmatpush1.xpose.msra.mxu0 0.0
        %1563 = vmatprep.subr.mxu0 0.0
        %1564 = vmatpush1.xpose.msra.mxu0 0.0
        %1565 = vmatprep.subr.mxu0 0.0
        %1566 = vmatpush1.xpose.msra.mxu0 0.0
        %1567 = vmatprep.subr.mxu0 0.0
        %1568 = vmatpush1.xpose.msra.mxu0 0.0
        %1569 = vmatprep.subr.mxu0 0.0
        %1570 = vmatpush1.xpose.msra.mxu0 0.0
        %1571 = vmatprep.subr.mxu0 0.0
        %1572 = vmatpush1.xpose.msra.mxu0 0.0
        %1573 = vmatprep.subr.mxu0 0.0
        %1574 = vmatpush1.xpose.msra.mxu0 0.0
        %1575 = vmatprep.subr.mxu0 0.0
        %1576 = vmatpush1.xpose.msra.mxu0 0.0
        %1577 = vmatprep.subr.mxu0 0.0
        %1578 = vmatpush1.xpose.msra.mxu0 0.0
        %1579 = vmatprep.subr.mxu0 0.0
        %1580 = vmatpush1.xpose.msra.mxu0 0.0
        %1581 = vmatprep.subr.mxu0 0.0
        %1582 = vmatpush1.xpose.msra.mxu0 0.0
        %1583 = vmatprep.subr.mxu0 0.0
        %1584 = vmatpush1.xpose.msra.mxu0 0.0
        %1585 = vmatprep.subr.mxu0 0.0
        %1586 = vmatpush1.xpose.msra.mxu0 0.0
        %1587 = vmatprep.subr.mxu0 0.0
        %1588 = vmatpush1.xpose.msra.mxu0 0.0
        %1589 = vmatprep.subr.mxu0 0.0
        %1590 = vmatpush1.xpose.msra.mxu0 0.0
        %1591 = vmatprep.subr.mxu0 0.0
        %1592 = vmatpush1.xpose.msra.mxu0 0.0
        %1593 = vmatprep.subr.mxu0 0.0
        %1594 = vmatpush1.xpose.msra.mxu0 0.0
        %1595 = vmatprep.subr.mxu0 0.0
        %1596 = vmatpush1.xpose.msra.mxu0 0.0
        %1597 = vmatprep.mubr.f32.mxu0 0.0
        %1598 = vmatmul.mubr.f32.gmra.mrb[0].mxu0 %v1504
        %v1599 = vpop.f32.mrb[0].mxu0
        %v1600 = vadd.f32 %v1501, %v1599
        %v1601 = vpop.f32.mrb[0].mxu0
        %1602 = vmatprep.mubr.f32.mxu0 0.0
        %1603 = vmatmul.mubr.f32.gmra.mrb[0].mxu0 %v1507
        %v1604 = vpop.f32.mrb[0].mxu0
        %v1605 = vadd.f32 %v1501, %v1604
        %v1606 = vpop.f32.mrb[0].mxu0
        %1607 = vdwg.mxu0
        %v1608 = vmax.f32 %v1600, 0.0
        %v1609 = vmax.f32 %v1605, 0.0
        %v1610 = vld [vmem:[%s520] sm:$0xff]
        %v1611 = vld [vmem:[%s520 + $0x8] sm:$0xff]
        %v1612 = vld [vmem:[%s520 + $0x10] sm:$0xff]
        %v1613 = vld [vmem:[%s520 + $0x18] sm:$0xff]
        %v1614 = vld [vmem:[%s520 + $0x20] sm:$0xff]
        %v1615 = vld [vmem:[%s520 + $0x28] sm:$0xff]
        %v1616 = vld [vmem:[%s520 + $0x30] sm:$0xff]
        %v1617 = vld [vmem:[%s520 + $0x38] sm:$0xff]
        %v1618 = vld [vmem:[%s523] sm:$0x1]
        %v1620 = vlaneseq
        %v1621 = vshrl.u32 %v1620, 7
        %v1622 = vsub.s32 0, %v1621
        %v1623 = vrot.slane %v1618, %v1622
        %v1626 = vsel %vm537, %v1608, 0
        %v1629 = vsel %vm537, %v1609, 0
        %v1632 = vsel %vm537, %v1610, 0
        %v1635 = vsel %vm537, %v1611, 0
        %v1638 = vsel %vm537, %v1612, 0
        %v1641 = vsel %vm537, %v1613, 0
        %v1644 = vsel %vm537, %v1614, 0
        %v1647 = vsel %vm537, %v1615, 0
        %v1650 = vsel %vm537, %v1616, 0
        %v1653 = vsel %vm537, %v1617, 0
        %1655 = vmatprep.subr.mxu0 0.0
        %1656 = vmatpush1.xpose.msra.mxu0 %v1632
        %1657 = vmatprep.subr.mxu0 0.0
        %1658 = vmatpush1.xpose.msra.mxu0 %v1635
        %1659 = vmatprep.subr.mxu0 0.0
        %1660 = vmatpush1.xpose.msra.mxu0 %v1638
        %1661 = vmatprep.subr.mxu0 0.0
        %1662 = vmatpush1.xpose.msra.mxu0 %v1641
        %1663 = vmatprep.subr.mxu0 0.0
        %1664 = vmatpush1.xpose.msra.mxu0 %v1644
        %1665 = vmatprep.subr.mxu0 0.0
        %1666 = vmatpush1.xpose.msra.mxu0 %v1647
        %1667 = vmatprep.subr.mxu0 0.0
        %1668 = vmatpush1.xpose.msra.mxu0 %v1650
        %1669 = vmatprep.subr.mxu0 0.0
        %1670 = vmatpush1.xpose.msra.mxu0 %v1653
        %1671 = vmatprep.subr.mxu0 0.0
        %1672 = vmatpush1.xpose.msra.mxu0 0.0
        %1673 = vmatprep.subr.mxu0 0.0
        %1674 = vmatpush1.xpose.msra.mxu0 0.0
        %1675 = vmatprep.subr.mxu0 0.0
        %1676 = vmatpush1.xpose.msra.mxu0 0.0
        %1677 = vmatprep.subr.mxu0 0.0
        %1678 = vmatpush1.xpose.msra.mxu0 0.0
        %1679 = vmatprep.subr.mxu0 0.0
        %1680 = vmatpush1.xpose.msra.mxu0 0.0
        %1681 = vmatprep.subr.mxu0 0.0
        %1682 = vmatpush1.xpose.msra.mxu0 0.0
        %1683 = vmatprep.subr.mxu0 0.0
        %1684 = vmatpush1.xpose.msra.mxu0 0.0
        %1685 = vmatprep.subr.mxu0 0.0
        %1686 = vmatpush1.xpose.msra.mxu0 0.0
        %1687 = vmatprep.subr.mxu0 0.0
        %1688 = vmatpush1.xpose.msra.mxu0 0.0
        %1689 = vmatprep.subr.mxu0 0.0
        %1690 = vmatpush1.xpose.msra.mxu0 0.0
        %1691 = vmatprep.subr.mxu0 0.0
        %1692 = vmatpush1.xpose.msra.mxu0 0.0
        %1693 = vmatprep.subr.mxu0 0.0
        %1694 = vmatpush1.xpose.msra.mxu0 0.0
        %1695 = vmatprep.subr.mxu0 0.0
        %1696 = vmatpush1.xpose.msra.mxu0 0.0
        %1697 = vmatprep.subr.mxu0 0.0
        %1698 = vmatpush1.xpose.msra.mxu0 0.0
        %1699 = vmatprep.subr.mxu0 0.0
        %1700 = vmatpush1.xpose.msra.mxu0 0.0
        %1701 = vmatprep.subr.mxu0 0.0
        %1702 = vmatpush1.xpose.msra.mxu0 0.0
        %1703 = vmatprep.subr.mxu0 0.0
        %1704 = vmatpush1.xpose.msra.mxu0 0.0
        %1705 = vmatprep.subr.mxu0 0.0
        %1706 = vmatpush1.xpose.msra.mxu0 0.0
        %1707 = vmatprep.subr.mxu0 0.0
        %1708 = vmatpush1.xpose.msra.mxu0 0.0
        %1709 = vmatprep.subr.mxu0 0.0
        %1710 = vmatpush1.xpose.msra.mxu0 0.0
        %1711 = vmatprep.subr.mxu0 0.0
        %1712 = vmatpush1.xpose.msra.mxu0 0.0
        %1713 = vmatprep.subr.mxu0 0.0
        %1714 = vmatpush1.xpose.msra.mxu0 0.0
        %1715 = vmatprep.subr.mxu0 0.0
        %1716 = vmatpush1.xpose.msra.mxu0 0.0
        %1717 = vmatprep.subr.mxu0 0.0
        %1718 = vmatpush1.xpose.msra.mxu0 0.0
        %1719 = vmatprep.mubr.f32.mxu0 0.0
        %1720 = vmatmul.mubr.f32.gmra.mrb[0].mxu0 %v1626
        %v1721 = vpop.f32.mrb[0].mxu0
        %v1722 = vadd.f32 %v1623, %v1721
        %v1723 = vpop.f32.mrb[0].mxu0
        %1724 = vmatprep.mubr.f32.mxu0 0.0
        %1725 = vmatmul.mubr.f32.gmra.mrb[0].mxu0 %v1629
        %v1726 = vpop.f32.mrb[0].mxu0
        %v1727 = vadd.f32 %v1623, %v1726
        %v1728 = vpop.f32.mrb[0].mxu0
        %1729 = vdwg.mxu0
        %v1730 = vmax.f32 %v1722, 0.0
        %v1731 = vmax.f32 %v1727, 0.0
        %v1732 = vadd.f32 %v1730, %v1442
        %v1733 = vadd.f32 %v1731, %v1443
        %1734 = vst.msk [vmem:[#allocation2] sm:$0xff] %vm537, %v1732
        %1735 = vst.msk [vmem:[#allocation2 + $0x8] sm:$0xff] %vm537, %v1733
        %p1736 = scmp.eq.s32.totalorder %s24, 1
        // Predicated region
        $region73: #{gpt_forward.1} parent=67 // pred_check
          %p1737 = pneg %p1736
        $region74: #{gpt_forward.1} parent=67 // pred_check_branch
          %1739 = sbr.rel (%p1737) target = $region76
        $region75: #{gpt_forward.1} parent=67 // pred_region
          %v1740 = vld [vmem:[%s10] sm:$0xff]
          %v1741 = vld [vmem:[%s10 + $0x8] sm:$0xff]
          %v1742 = vld [vmem:[%s10 + $0x10] sm:$0xff]
          %v1743 = vld [vmem:[%s10 + $0x18] sm:$0xff]
          %v1744 = vld [vmem:[%s10 + $0x20] sm:$0xff]
          %v1745 = vld [vmem:[%s10 + $0x28] sm:$0xff]
          %v1746 = vld [vmem:[%s10 + $0x30] sm:$0xff]
          %v1747 = vld [vmem:[%s10 + $0x38] sm:$0xff]
          %v1748 = vld [vmem:[%s10 + $0x40] sm:$0xff]
          %v1749 = vld [vmem:[%s10 + $0x48] sm:$0xff]
          %v1750 = vld [vmem:[%s10 + $0x50] sm:$0xff]
          %v1751 = vld [vmem:[%s10 + $0x58] sm:$0xff]
          %v1752 = vld [vmem:[%s10 + $0x60] sm:$0xff]
          %v1753 = vld [vmem:[%s10 + $0x68] sm:$0xff]
          %v1754 = vld [vmem:[%s10 + $0x70] sm:$0xff]
          %v1755 = vld [vmem:[%s10 + $0x78] sm:$0xff]
          %v1756 = vld [vmem:[%s11] sm:$0x1]
          %v1758 = vlaneseq
          %v1759 = vshrl.u32 %v1758, 7
          %v1760 = vsub.s32 0, %v1759
          %v1761 = vrot.slane %v1756, %v1760
          %v1764 = vsel %vm537, %v1732, 0
          %v1767 = vsel %vm537, %v1733, 0
          %v1770 = vsel %vm537, %v1740, 0
          %v1773 = vsel %vm537, %v1741, 0
          %v1776 = vsel %vm537, %v1742, 0
          %v1779 = vsel %vm537, %v1743, 0
          %v1782 = vsel %vm537, %v1744, 0
          %v1785 = vsel %vm537, %v1745, 0
          %v1788 = vsel %vm537, %v1746, 0
          %v1791 = vsel %vm537, %v1747, 0
          %v1794 = vsel %vm537, %v1748, 0
          %v1797 = vsel %vm537, %v1749, 0
          %v1800 = vsel %vm537, %v1750, 0
          %v1803 = vsel %vm537, %v1751, 0
          %v1806 = vsel %vm537, %v1752, 0
          %v1809 = vsel %vm537, %v1753, 0
          %v1812 = vsel %vm537, %v1754, 0
          %v1815 = vsel %vm537, %v1755, 0
          %1817 = vmatprep.subr.mxu0 0.0
          %1818 = vmatpush1.xpose.msra.mxu0 %v1770
          %1819 = vmatprep.subr.mxu0 0.0
          %1820 = vmatpush1.xpose.msra.mxu0 %v1773
          %1821 = vmatprep.subr.mxu0 0.0
          %1822 = vmatpush1.xpose.msra.mxu0 %v1776
          %1823 = vmatprep.subr.mxu0 0.0
          %1824 = vmatpush1.xpose.msra.mxu0 %v1779
          %1825 = vmatprep.subr.mxu0 0.0
          %1826 = vmatpush1.xpose.msra.mxu0 %v1782
          %1827 = vmatprep.subr.mxu0 0.0
          %1828 = vmatpush1.xpose.msra.mxu0 %v1785
          %1829 = vmatprep.subr.mxu0 0.0
          %1830 = vmatpush1.xpose.msra.mxu0 %v1788
          %1831 = vmatprep.subr.mxu0 0.0
          %1832 = vmatpush1.xpose.msra.mxu0 %v1791
          %1833 = vmatprep.subr.mxu0 0.0
          %1834 = vmatpush1.xpose.msra.mxu0 %v1794
          %1835 = vmatprep.subr.mxu0 0.0
          %1836 = vmatpush1.xpose.msra.mxu0 %v1797
          %1837 = vmatprep.subr.mxu0 0.0
          %1838 = vmatpush1.xpose.msra.mxu0 %v1800
          %1839 = vmatprep.subr.mxu0 0.0
          %1840 = vmatpush1.xpose.msra.mxu0 %v1803
          %1841 = vmatprep.subr.mxu0 0.0
          %1842 = vmatpush1.xpose.msra.mxu0 %v1806
          %1843 = vmatprep.subr.mxu0 0.0
          %1844 = vmatpush1.xpose.msra.mxu0 %v1809
          %1845 = vmatprep.subr.mxu0 0.0
          %1846 = vmatpush1.xpose.msra.mxu0 %v1812
          %1847 = vmatprep.subr.mxu0 0.0
          %1848 = vmatpush1.xpose.msra.mxu0 %v1815
          %1849 = vmatprep.subr.mxu0 0.0
          %1850 = vmatpush1.xpose.msra.mxu0 0.0
          %1851 = vmatprep.subr.mxu0 0.0
          %1852 = vmatpush1.xpose.msra.mxu0 0.0
          %1853 = vmatprep.subr.mxu0 0.0
          %1854 = vmatpush1.xpose.msra.mxu0 0.0
          %1855 = vmatprep.subr.mxu0 0.0
          %1856 = vmatpush1.xpose.msra.mxu0 0.0
          %1857 = vmatprep.subr.mxu0 0.0
          %1858 = vmatpush1.xpose.msra.mxu0 0.0
          %1859 = vmatprep.subr.mxu0 0.0
          %1860 = vmatpush1.xpose.msra.mxu0 0.0
          %1861 = vmatprep.subr.mxu0 0.0
          %1862 = vmatpush1.xpose.msra.mxu0 0.0
          %1863 = vmatprep.subr.mxu0 0.0
          %1864 = vmatpush1.xpose.msra.mxu0 0.0
          %1865 = vmatprep.subr.mxu0 0.0
          %1866 = vmatpush1.xpose.msra.mxu0 0.0
          %1867 = vmatprep.subr.mxu0 0.0
          %1868 = vmatpush1.xpose.msra.mxu0 0.0
          %1869 = vmatprep.subr.mxu0 0.0
          %1870 = vmatpush1.xpose.msra.mxu0 0.0
          %1871 = vmatprep.subr.mxu0 0.0
          %1872 = vmatpush1.xpose.msra.mxu0 0.0
          %1873 = vmatprep.subr.mxu0 0.0
          %1874 = vmatpush1.xpose.msra.mxu0 0.0
          %1875 = vmatprep.subr.mxu0 0.0
          %1876 = vmatpush1.xpose.msra.mxu0 0.0
          %1877 = vmatprep.subr.mxu0 0.0
          %1878 = vmatpush1.xpose.msra.mxu0 0.0
          %1879 = vmatprep.subr.mxu0 0.0
          %1880 = vmatpush1.xpose.msra.mxu0 0.0
          %1881 = vmatprep.mubr.f32.mxu0 0.0
          %1882 = vmatmul.mubr.f32.gmra.mrb[0].mxu0 %v1764
          %v1883 = vpop.f32.mrb[0].mxu0
          %v1884 = vadd.f32 %v1761, %v1883
          %v1885 = vpop.f32.mrb[0].mxu0
          %1886 = vmatprep.mubr.f32.mxu0 0.0
          %1887 = vmatmul.mubr.f32.gmra.mrb[0].mxu0 %v1767
          %v1888 = vpop.f32.mrb[0].mxu0
          %v1889 = vadd.f32 %v1761, %v1888
          %v1890 = vpop.f32.mrb[0].mxu0
          %1891 = vdwg.mxu0
          %1892 = vst [vmem:[#allocation4] sm:$0xff] %v1884
          %1893 = vst [vmem:[#allocation4 + $0x8] sm:$0xff] %v1889
        $region76: #{gpt_forward.1} parent=67 // pred_fallthru
          _
        // Predicated region
        $region77: #{gpt_forward.1} parent=67 // pred_check
          %p1894 = pneg %p334
        $region78: #{gpt_forward.1} parent=67 // pred_check_branch
          %1896 = sbr.rel (%p1894) target = $region80
        $region79: #{gpt_forward.1} parent=67 // pred_region
          %s1898 = ssub.s32 256, 256
          %1899 = vsyncadd [#allocation5], %s1898
          %s1900 = sshll.u32 [#allocation4], 4
          %s1901 = int_to_ptr.vmem [resolvable:$true] %s1900
          %1906 = dma.vmem_to_hbm [thread:$0]  %s1901, 256, %s12, [#allocation5], 128, 128, 8
        $region80: #{gpt_forward.1} parent=67 // pred_fallthru
          _
        // Predicated region
        $region81: #{gpt_forward.1} parent=67 // pred_check
          %p1907 = pneg %p334
        $region82: #{gpt_forward.1} parent=67 // pred_check_branch
          %1909 = sbr.rel (%p1907) target = $region84
        $region83: #{gpt_forward.1} parent=67 // pred_region
          %1910 = dma.done [#allocation5], 256
        $region84: #{gpt_forward.1} parent=67 // pred_fallthru
          _
      $region68: #{gpt_forward.1} parent=5 // pred_fallthru
        _
      %p1911 = scmp.le.s32.totalorder 2, %s19
      // Predicated region
      $region85: #{gpt_forward.1} parent=5 // pred_check
        %p1912 = pneg %p1911
      $region86: #{gpt_forward.1} parent=5 // pred_check_branch
        %1914 = sbr.rel (%p1912) target = $region88
      $region87: #{gpt_forward.1} parent=5 // pred_region
        %s1915 = ssub.s32 %s19, 2
      $region88: #{gpt_forward.1} parent=5 // pred_fallthru
        _
    $region6: #{gpt_forward.1} parent=1 // loop_footer
      %s23 = sadd.s32 1, %s19
    $region7: #{gpt_forward.1} parent=1 // loop_footer_branch
      %18 = sbr.rel target = $region3
    $region8: #{gpt_forward.1} parent=1 // loop_exit
      _
    %1916 = vsyncpa [#allocation5], 1
    %s1917 = scalar_lea.sflag [#allocation5], 1
    %1918 = vsyncpa %s1917, 1

</llo_original>
